<compile_context>
chip_gen: v6e
topology: v6e:2x2x1
jax: 0.10.0
libtpu: 0.0.40
codegen_flags: <defaults>
</compile_context>

<pallas_src>
import jax
import jax.numpy as jnp
from jax import lax
from jax.experimental import pallas as pl
from jax.experimental.pallas import tpu as pltpu

LANE = 128
SUBLANE = 8


def _ceil_to(v, m):
    return ((v + m - 1) // m) * m


def _pad_to(a, shape):
    return jnp.pad(a, [(0, t - s) for s, t in zip(a.shape, shape)])


def bottleneck_pallas(x_nhwc, params, row_tile=None, out_dtype=jnp.bfloat16):
    N, H, W, Cin = x_nhwc.shape
    w1, w2, w3 = params["w1"], params["w2"], params["w3"]
    P = w1.shape[1]
    Cout = w3.shape[1]
    assert Cin == Cout, "downsample=None requires inplanes == planes*expansion"

    Cinp, Pp, Coutp = _ceil_to(Cin, LANE), _ceil_to(P, LANE), _ceil_to(Cout, LANE)
    Wp = _ceil_to(W, SUBLANE)          # lane/sublane-friendly padded width

    # Row tile: target M = TH*Wp up to ~2048 rows for good MXU M utilization
    # and low (TH+2)/TH halo overhead, while keeping >= 2 tiles per image so
    # the (batch, row) grid still feeds the pipeline / both TensorCores.
    if row_tile is None:
        divs = [d for d in range(1, H + 1) if H % d == 0]
        ok = [d for d in divs if d * Wp <= 2048 and H // d >= 2]
        row_tile = max(ok) if ok else max([d for d in divs if H // d >= 2] or [H])
    TH = row_tile
    assert H % TH == 0
    nR = H // TH
    M = TH * Wp            # output rows per grid step (multiple of 8)
    M2 = (TH + 2) * Wp     # input rows incl. the 1-row halo above/below

    bf16 = jnp.bfloat16
    f32 = jnp.float32

    # ---- Host-side one-time prep -------------------------------------------
    # Pad W to Wp and channels to 128 lanes, cast MXU inputs to bf16, add one
    # zero row above/below (conv2 halo source), then pre-materialize the
    # overlapping (TH+2)*Wp halo tiles so each grid step only DMAs its window.
    x_p = _pad_to(x_nhwc.astype(bf16), (N, H, Wp, Cinp))
    x_p = jnp.pad(x_p, ((0, 0), (1, 1), (0, 0), (0, 0)))
    x_flat = x_p.reshape(N, (H + 2) * Wp, Cinp)
    x_tiles = jnp.stack(
        [x_flat[:, r * TH * Wp:(r * TH + TH + 2) * Wp, :] for r in range(nR)],
        axis=1)                                            # (N, nR, M2, Cinp)

    w1p = _pad_to(w1.astype(bf16), (Cinp, Pp))
    w2p = _pad_to(w2.astype(bf16), (3, 3, Pp, Pp))         # HWIO
    w2s = w2p.reshape(9 * Pp, Pp)                          # rows = (ky, kx, cin)
    w3p = _pad_to(w3.astype(bf16), (Pp, Coutp))

    def pad_vec(v, t):
        return _pad_to(v.reshape(1, -1).astype(f32), (1, t))

    s1, b1 = pad_vec(params["s1"], Pp), pad_vec(params["b1"], Pp)
    s2, b2 = pad_vec(params["s2"], Pp), pad_vec(params["b2"], Pp)
    s3, b3 = pad_vec(params["s3"], Coutp), pad_vec(params["b3"], Coutp)

    def kernel(x_ref, w1_ref, w2_ref, w3_ref,
               s1_ref, b1_ref, s2_ref, b2_ref, s3_ref, b3_ref, o_ref):
        r = pl.program_id(1)
        n_r = pl.num_programs(1)

        xs = x_ref[0, 0]                                   # (M2, Cinp) bf16

        # ---- conv1 (1x1) + bn1 + relu: bf16 MXU, f32 accumulate/epilogue ----
        h1 = jnp.dot(xs, w1_ref[...], preferred_element_type=f32)
        h1 = jnp.maximum(h1 * s1_ref[...] + b1_ref[...], 0.0)   # (M2, Pp) f32

        # Cheap masking: (M2,1) predicates, one broadcast multiply.
        # Halo rows at the true image top/bottom (and padded W columns) must
        # be zero *after* bn1+relu (the bn bias makes them nonzero otherwise).
        ri = lax.broadcasted_iota(jnp.int32, (M2, 1), 0)
        col = ri % Wp
        drop = ((ri < Wp) & (r == 0)) | ((ri >= M2 - Wp) & (r == n_r - 1))
        if Wp != W:
            drop = drop | (col >= W)
        h1 = h1 * jnp.logical_not(drop).astype(f32)

        # ---- conv2 (3x3, pad 1) as ONE K=9*Pp matmul ----
        # Column +/-1 shifts via pltpu.roll (XLU, f32) + a (M2,1) wrap mask;
        # row shifts are sublane-aligned static slices of the flattened halo
        # tile.  Taps are cast to bf16 BEFORE the concat -> the (M, 9*Pp)
        # slab is built directly in bf16 (no f32 copy).
        left_ok = (col != 0).astype(f32)
        right_ok = (col != Wp - 1).astype(f32)
        s_l = (pltpu.roll(h1, shift=1, axis=0) * left_ok).astype(bf16)
        s_c = h1.astype(bf16)
        s_r = (pltpu.roll(h1, shift=M2 - 1, axis=0) * right_ok).astype(bf16)
        shifted = (s_l, s_c, s_r)
        taps = [shifted[kx][ky * Wp: ky * Wp + M, :]
                for ky in range(3) for kx in range(3)]
        lhs = jnp.concatenate(taps, axis=1)                # (M, 9*Pp) bf16
        h2 = jnp.dot(lhs, w2_ref[...], preferred_element_type=f32)
        h2 = jnp.maximum(h2 * s2_ref[...] + b2_ref[...], 0.0)   # (M, Pp) f32

        # ---- conv3 (1x1) + bn3 + identity residual + relu ----
        h3 = jnp.dot(h2.astype(bf16), w3_ref[...], preferred_element_type=f32)
        h3 = h3 * s3_ref[...] + b3_ref[...]
        # Residual from the bf16-cast input (the pure-JAX reference mirrors
        # this mixed-precision choice).
        res = xs[Wp:Wp + M, :].astype(f32)
        o_ref[0] = jnp.maximum(h3 + res, 0.0).astype(o_ref.dtype)

    flops = 2 * N * H * Wp * (Cinp * Pp + 9 * Pp * Pp + Pp * Coutp)
    bytes_accessed = int(
        x_tiles.size * 2 + N * H * Wp * Coutp * 2
        + (w1p.size + w2s.size + w3p.size) * 2
        + (s1.size + b1.size + s2.size + b2.size + s3.size + b3.size) * 4)

    # Per-step VMEM: double-buffered x/out tiles, resident weights (counted
    # x2 conservatively), bf16 conv2 LHS slab, f32 intermediates.  x2
    # headroom for spills / compiler-internal scratch; floor 32 MiB, cap
    # 64 MiB (v7x physical VMEM).
    per_step = (
        2 * M2 * Cinp * 2 + 2 * M * Coutp * 2
        + 2 * (w1p.size + w2s.size + w3p.size) * 2
        + M * 9 * Pp * 2
        + 3 * M2 * Pp * 4 + M * Pp * 4 + M * Coutp * 4)
    vmem_limit = min(max(2 * per_step, 32 * 1024 * 1024), 64 * 1024 * 1024)

    out_flat = pl.pallas_call(
        kernel,
        out_shape=jax.ShapeDtypeStruct((N, H * Wp, Coutp), out_dtype),
        grid=(N, nR),
        in_specs=[
            pl.BlockSpec((1, 1, M2, Cinp), lambda n, r: (n, r, 0, 0)),  # x halo tile
            pl.BlockSpec((Cinp, Pp), lambda n, r: (0, 0)),              # w1
            pl.BlockSpec((9 * Pp, Pp), lambda n, r: (0, 0)),            # w2 (stacked)
            pl.BlockSpec((Pp, Coutp), lambda n, r: (0, 0)),             # w3
            pl.BlockSpec((1, Pp), lambda n, r: (0, 0)),                 # s1
            pl.BlockSpec((1, Pp), lambda n, r: (0, 0)),                 # b1
            pl.BlockSpec((1, Pp), lambda n, r: (0, 0)),                 # s2
            pl.BlockSpec((1, Pp), lambda n, r: (0, 0)),                 # b2
            pl.BlockSpec((1, Coutp), lambda n, r: (0, 0)),              # s3
            pl.BlockSpec((1, Coutp), lambda n, r: (0, 0)),              # b3
        ],
        out_specs=pl.BlockSpec((1, M, Coutp), lambda n, r: (n, r, 0)),
        compiler_params=pltpu.CompilerParams(
            dimension_semantics=("parallel", "parallel"),
            vmem_limit_bytes=int(vmem_limit)),
        cost_estimate=pl.CostEstimate(flops=flops, transcendentals=0,
                                      bytes_accessed=bytes_accessed),
    )(x_tiles, w1p, w2s, w3p, s1, b1, s2, b2, s3, b3)

    return out_flat.reshape(N, H, Wp, Coutp)[:, :, :W, :Cout]


def make_params(key, inplanes, planes, expansion=4, eps=1e-5):
    P, Cout = planes, planes * expansion
    ks = jax.random.split(key, 15)

    def folded_bn(kg, kb, km, kv, c):
        gamma = 1.0 + 0.1 * jax.random.normal(kg, (c,), jnp.float32)
        beta = 0.1 * jax.random.normal(kb, (c,), jnp.float32)
        mean = 0.1 * jax.random.normal(km, (c,), jnp.float32)
        var = 0.5 + jnp.abs(jax.random.normal(kv, (c,), jnp.float32)) * 0.1
        scale = gamma / jnp.sqrt(var + eps)
        bias = beta - mean * scale
        return scale, bias

    w1 = 0.1 * jax.random.normal(ks[0], (inplanes, P), jnp.float32)
    w2 = 0.1 * jax.random.normal(ks[1], (3, 3, P, P), jnp.float32)   # HWIO
    w3 = 0.1 * jax.random.normal(ks[2], (P, Cout), jnp.float32)
    s1, b1 = folded_bn(ks[3], ks[4], ks[5], ks[6], P)
    s2, b2 = folded_bn(ks[7], ks[8], ks[9], ks[10], P)
    s3, b3 = folded_bn(ks[11], ks[12], ks[13], ks[14], Cout)
    return dict(w1=w1, w2=w2, w3=w3, s1=s1, b1=b1, s2=s2, b2=b2, s3=s3, b3=b3)


def bottleneck_ref(x, p):
    """Pure-JAX NHWC reference mirroring the kernel's mixed-precision policy
    (bf16 matmul/conv inputs, f32 accumulation, f32 BN/ReLU epilogues)."""
    bf = jnp.bfloat16
    N, H, W, Cin = x.shape
    P = p["w1"].shape[1]

    def bn(h, s, b):
        return h * s.reshape(1, 1, 1, -1) + b.reshape(1, 1, 1, -1)

    x_bf = x.astype(bf)
    h1 = jnp.dot(x_bf.reshape(-1, Cin), p["w1"].astype(bf),
                 preferred_element_type=jnp.float32).reshape(N, H, W, P)
    h1 = jnp.maximum(bn(h1, p["s1"], p["b1"]), 0.0)
    h2 = lax.conv_general_dilated(h1.astype(bf), p["w2"].astype(bf),
                                  window_strides=(1, 1),
                                  padding=((1, 1), (1, 1)),
                                  dimension_numbers=("NHWC", "HWIO", "NHWC"),
                                  preferred_element_type=jnp.float32)
    h2 = jnp.maximum(bn(h2, p["s2"], p["b2"]), 0.0)
    h3 = jnp.dot(h2.astype(bf).reshape(-1, P), p["w3"].astype(bf),
                 preferred_element_type=jnp.float32).reshape(N, H, W, -1)
    h3 = bn(h3, p["s3"], p["b3"])
    return jnp.maximum(h3 + x_bf.astype(jnp.float32), 0.0)


if __name__ == "__main__":
    key = jax.random.PRNGKey(0)
    kx, kp = jax.random.split(key)

    N, planes, expansion, H, W = 2, 4, 4, 8, 8
    inplanes = planes * expansion          # 16: required for identity residual

    # PyTorch-style NCHW input; one-time NHWC transpose kept outside the kernel.
    x_nchw = jax.random.normal(kx, (N, inplanes, H, W), jnp.float32)
    x_nhwc = jnp.transpose(x_nchw, (0, 2, 3, 1))

    params = make_params(kp, inplanes, planes, expansion)

    out = bottleneck_pallas(x_nhwc, params)
    out = jax.block_until_ready(out)

    ref = bottleneck_ref(x_nhwc, params)
    assert out.shape == (N, H, W, planes * expansion)
    out_f = out.astype(jnp.float32)
    max_err = float(jnp.max(jnp.abs(out_f - ref)))
    assert jnp.allclose(out_f, ref, atol=5e-2, rtol=5e-2), max_err

    print("KERNEL_OK")
</pallas_src>

<mosaic_0001>
module attributes {stable_mosaic.version = 11 : i64} {
  func.func @kernel(%arg0: i32, %arg1: i32, %arg2: memref<1x1x48x128xbf16, #tpu.memory_space<vmem>>, %arg3: memref<128x128xbf16, #tpu.memory_space<vmem>>, %arg4: memref<1152x128xbf16, #tpu.memory_space<vmem>>, %arg5: memref<128x128xbf16, #tpu.memory_space<vmem>>, %arg6: memref<1x128xf32, #tpu.memory_space<vmem>>, %arg7: memref<1x128xf32, #tpu.memory_space<vmem>>, %arg8: memref<1x128xf32, #tpu.memory_space<vmem>>, %arg9: memref<1x128xf32, #tpu.memory_space<vmem>>, %arg10: memref<1x128xf32, #tpu.memory_space<vmem>>, %arg11: memref<1x128xf32, #tpu.memory_space<vmem>>, %arg12: memref<1x32x128xbf16, #tpu.memory_space<vmem>>) attributes {dimension_semantics = [#tpu.dimension_semantics<parallel>, #tpu.dimension_semantics<parallel>], iteration_bounds = array<i64: 2, 2>, scalar_prefetch = 0 : i64, scratch_operands = 0 : i64, tpu.core_type = #tpu.core_type<tc>, window_params = [{transform_indices = @transform_0, window_bounds = array<i64: 1, 1, 48, 128>}, {pipeline_mode = #tpu.pipeline_mode<synchronous>, transform_indices = @transform_1, window_bounds = array<i64: 128, 128>}, {pipeline_mode = #tpu.pipeline_mode<synchronous>, transform_indices = @transform_2, window_bounds = array<i64: 1152, 128>}, {pipeline_mode = #tpu.pipeline_mode<synchronous>, transform_indices = @transform_3, window_bounds = array<i64: 128, 128>}, {pipeline_mode = #tpu.pipeline_mode<synchronous>, transform_indices = @transform_4, window_bounds = array<i64: 1, 128>}, {pipeline_mode = #tpu.pipeline_mode<synchronous>, transform_indices = @transform_5, window_bounds = array<i64: 1, 128>}, {pipeline_mode = #tpu.pipeline_mode<synchronous>, transform_indices = @transform_6, window_bounds = array<i64: 1, 128>}, {pipeline_mode = #tpu.pipeline_mode<synchronous>, transform_indices = @transform_7, window_bounds = array<i64: 1, 128>}, {pipeline_mode = #tpu.pipeline_mode<synchronous>, transform_indices = @transform_8, window_bounds = array<i64: 1, 128>}, {pipeline_mode = #tpu.pipeline_mode<synchronous>, transform_indices = @transform_9, window_bounds = array<i64: 1, 128>}, {transform_indices = @transform_10, window_bounds = array<i64: 1, 32, 128>}]} {
    %c0 = arith.constant 0 : index
    %c0_0 = arith.constant 0 : index
    %c0_1 = arith.constant 0 : index
    %c0_2 = arith.constant 0 : index
    %0 = vector.load %arg2[%c0, %c0_0, %c0_1, %c0_2] : memref<1x1x48x128xbf16, #tpu.memory_space<vmem>>, vector<1x1x48x128xbf16>
    %1 = vector.shape_cast %0 : vector<1x1x48x128xbf16> to vector<48x128xbf16>
    %c0_3 = arith.constant 0 : index
    %c0_4 = arith.constant 0 : index
    %2 = vector.load %arg3[%c0_3, %c0_4] : memref<128x128xbf16, #tpu.memory_space<vmem>>, vector<128x128xbf16>
    %cst = arith.constant dense<0.000000e+00> : vector<48x128xf32>
    %3 = tpu.matmul %1, %2, %cst {dimension_numbers = #tpu.dot_dimension_numbers<[1], [0], [0], [1], [0, 0, 1, 1], [], []>} : vector<48x128xbf16>, vector<128x128xbf16>, vector<48x128xf32> -> vector<48x128xf32>
    %c0_5 = arith.constant 0 : index
    %c0_6 = arith.constant 0 : index
    %4 = vector.load %arg6[%c0_5, %c0_6] : memref<1x128xf32, #tpu.memory_space<vmem>>, vector<1x128xf32>
    %5 = vector.broadcast %4 : vector<1x128xf32> to vector<48x128xf32>
    %6 = arith.mulf %3, %5 : vector<48x128xf32>
    %c0_7 = arith.constant 0 : index
    %c0_8 = arith.constant 0 : index
    %7 = vector.load %arg7[%c0_7, %c0_8] : memref<1x128xf32, #tpu.memory_space<vmem>>, vector<1x128xf32>
    %8 = vector.broadcast %7 : vector<1x128xf32> to vector<48x128xf32>
    %9 = arith.addf %6, %8 : vector<48x128xf32>
    %cst_9 = arith.constant 0.000000e+00 : f32
    %10 = vector.broadcast %cst_9 : f32 to vector<48x128xf32>
    %11 = arith.maximumf %9, %10 : vector<48x128xf32>
    %12 = tpu.iota {dimensions = array<i32: 0>} : vector<48x1xi32>
    %c8_i32 = arith.constant 8 : i32
    %c0_i32 = arith.constant 0 : i32
    %13 = arith.cmpi eq, %c8_i32, %c0_i32 : i32
    %c1_i32 = arith.constant 1 : i32
    %14 = arith.select %13, %c1_i32, %c8_i32 : i32
    %15 = vector.broadcast %14 : i32 to vector<48x1xi32>
    %16 = arith.remsi %12, %15 : vector<48x1xi32>
    %c0_i32_10 = arith.constant 0 : i32
    %17 = vector.broadcast %c0_i32_10 : i32 to vector<48x1xi32>
    %18 = arith.cmpi ne, %16, %17 : vector<48x1xi32>
    %c0_i32_11 = arith.constant 0 : i32
    %19 = vector.broadcast %c0_i32_11 : i32 to vector<48x1xi32>
    %20 = arith.cmpi slt, %16, %19 : vector<48x1xi32>
    %c0_i32_12 = arith.constant 0 : i32
    %21 = arith.cmpi slt, %14, %c0_i32_12 : i32
    %22 = vector.broadcast %21 : i1 to vector<48x1xi1>
    %23 = vector.broadcast %22 : vector<48x1xi1> to vector<48x1xi1>
    %24 = arith.xori %20, %23 : vector<48x1xi1>
    %25 = arith.andi %24, %18 : vector<48x1xi1>
    %26 = vector.broadcast %14 : i32 to vector<48x1xi32>
    %27 = arith.addi %16, %26 : vector<48x1xi32>
    %28 = arith.select %25, %27, %16 : vector<48x1xi1>, vector<48x1xi32>
    %c8_i32_13 = arith.constant 8 : i32
    %29 = vector.broadcast %c8_i32_13 : i32 to vector<48x1xi32>
    %30 = arith.cmpi slt, %12, %29 : vector<48x1xi32>
    %c0_i32_14 = arith.constant 0 : i32
    %31 = arith.cmpi eq, %arg1, %c0_i32_14 : i32
    %32 = vector.broadcast %31 : i1 to vector<48x1xi1>
    %33 = arith.andi %30, %32 : vector<48x1xi1>
    %c40_i32 = arith.constant 40 : i32
    %34 = vector.broadcast %c40_i32 : i32 to vector<48x1xi32>
    %35 = arith.cmpi sge, %12, %34 : vector<48x1xi32>
    %c1_i32_15 = arith.constant 1 : i32
    %36 = arith.cmpi eq, %arg1, %c1_i32_15 : i32
    %37 = vector.broadcast %36 : i1 to vector<48x1xi1>
    %38 = arith.andi %35, %37 : vector<48x1xi1>
    %39 = arith.ori %33, %38 : vector<48x1xi1>
    %cst_16 = arith.constant dense<true> : vector<48x1xi1>
    %40 = arith.xori %39, %cst_16 : vector<48x1xi1>
    %41 = arith.extui %40 : vector<48x1xi1> to vector<48x1xi32>
    %42 = arith.sitofp %41 : vector<48x1xi32> to vector<48x1xf32>
    %43 = vector.broadcast %42 : vector<48x1xf32> to vector<48x128xf32>
    %44 = arith.mulf %11, %43 : vector<48x128xf32>
    %c0_i32_17 = arith.constant 0 : i32
    %45 = vector.broadcast %c0_i32_17 : i32 to vector<48x1xi32>
    %46 = arith.cmpi ne, %28, %45 : vector<48x1xi32>
    %47 = arith.extui %46 : vector<48x1xi1> to vector<48x1xi32>
    %48 = arith.sitofp %47 : vector<48x1xi32> to vector<48x1xf32>
    %c7_i32 = arith.constant 7 : i32
    %49 = vector.broadcast %c7_i32 : i32 to vector<48x1xi32>
    %50 = arith.cmpi ne, %28, %49 : vector<48x1xi32>
    %51 = arith.extui %50 : vector<48x1xi1> to vector<48x1xi32>
    %52 = arith.sitofp %51 : vector<48x1xi32> to vector<48x1xf32>
    %c1_i32_18 = arith.constant 1 : i32
    %53 = tpu.dynamic_rotate %44 by %c1_i32_18 dim 0 : vector<48x128xf32>, i32 -> vector<48x128xf32>
    %54 = vector.broadcast %48 : vector<48x1xf32> to vector<48x128xf32>
    %55 = arith.mulf %53, %54 : vector<48x128xf32>
    %56 = arith.truncf %55 : vector<48x128xf32> to vector<48x128xbf16>
    %57 = arith.truncf %44 : vector<48x128xf32> to vector<48x128xbf16>
    %c47_i32 = arith.constant 47 : i32
    %58 = tpu.dynamic_rotate %44 by %c47_i32 dim 0 : vector<48x128xf32>, i32 -> vector<48x128xf32>
    %59 = vector.broadcast %52 : vector<48x1xf32> to vector<48x128xf32>
    %60 = arith.mulf %58, %59 : vector<48x128xf32>
    %61 = arith.truncf %60 : vector<48x128xf32> to vector<48x128xbf16>
    %62 = vector.extract_strided_slice %56 {offsets = [0, 0], sizes = [32, 128], strides = [1, 1]} : vector<48x128xbf16> to vector<32x128xbf16>
    %63 = vector.extract_strided_slice %57 {offsets = [0, 0], sizes = [32, 128], strides = [1, 1]} : vector<48x128xbf16> to vector<32x128xbf16>
    %64 = vector.extract_strided_slice %61 {offsets = [0, 0], sizes = [32, 128], strides = [1, 1]} : vector<48x128xbf16> to vector<32x128xbf16>
    %65 = vector.extract_strided_slice %56 {offsets = [8, 0], sizes = [32, 128], strides = [1, 1]} : vector<48x128xbf16> to vector<32x128xbf16>
    %66 = vector.extract_strided_slice %57 {offsets = [8, 0], sizes = [32, 128], strides = [1, 1]} : vector<48x128xbf16> to vector<32x128xbf16>
    %67 = vector.extract_strided_slice %61 {offsets = [8, 0], sizes = [32, 128], strides = [1, 1]} : vector<48x128xbf16> to vector<32x128xbf16>
    %68 = vector.extract_strided_slice %56 {offsets = [16, 0], sizes = [32, 128], strides = [1, 1]} : vector<48x128xbf16> to vector<32x128xbf16>
    %69 = vector.extract_strided_slice %57 {offsets = [16, 0], sizes = [32, 128], strides = [1, 1]} : vector<48x128xbf16> to vector<32x128xbf16>
    %70 = vector.extract_strided_slice %61 {offsets = [16, 0], sizes = [32, 128], strides = [1, 1]} : vector<48x128xbf16> to vector<32x128xbf16>
    %71 = tpu.concatenate %62, %63, %64, %65, %66, %67, %68, %69, %70 in 1 : vector<32x128xbf16>, vector<32x128xbf16>, vector<32x128xbf16>, vector<32x128xbf16>, vector<32x128xbf16>, vector<32x128xbf16>, vector<32x128xbf16>, vector<32x128xbf16>, vector<32x128xbf16> -> vector<32x1152xbf16>
    %c0_19 = arith.constant 0 : index
    %c0_20 = arith.constant 0 : index
    %72 = vector.load %arg4[%c0_19, %c0_20] : memref<1152x128xbf16, #tpu.memory_space<vmem>>, vector<1152x128xbf16>
    %cst_21 = arith.constant dense<0.000000e+00> : vector<32x128xf32>
    %73 = tpu.matmul %71, %72, %cst_21 {dimension_numbers = #tpu.dot_dimension_numbers<[1], [0], [0], [1], [0, 0, 1, 1], [], []>} : vector<32x1152xbf16>, vector<1152x128xbf16>, vector<32x128xf32> -> vector<32x128xf32>
    %c0_22 = arith.constant 0 : index
    %c0_23 = arith.constant 0 : index
    %74 = vector.load %arg8[%c0_22, %c0_23] : memref<1x128xf32, #tpu.memory_space<vmem>>, vector<1x128xf32>
    %75 = vector.broadcast %74 : vector<1x128xf32> to vector<32x128xf32>
    %76 = arith.mulf %73, %75 : vector<32x128xf32>
    %c0_24 = arith.constant 0 : index
    %c0_25 = arith.constant 0 : index
    %77 = vector.load %arg9[%c0_24, %c0_25] : memref<1x128xf32, #tpu.memory_space<vmem>>, vector<1x128xf32>
    %78 = vector.broadcast %77 : vector<1x128xf32> to vector<32x128xf32>
    %79 = arith.addf %76, %78 : vector<32x128xf32>
    %cst_26 = arith.constant 0.000000e+00 : f32
    %80 = vector.broadcast %cst_26 : f32 to vector<32x128xf32>
    %81 = arith.maximumf %79, %80 : vector<32x128xf32>
    %82 = arith.truncf %81 : vector<32x128xf32> to vector<32x128xbf16>
    %c0_27 = arith.constant 0 : index
    %c0_28 = arith.constant 0 : index
    %83 = vector.load %arg5[%c0_27, %c0_28] : memref<128x128xbf16, #tpu.memory_space<vmem>>, vector<128x128xbf16>
    %cst_29 = arith.constant dense<0.000000e+00> : vector<32x128xf32>
    %84 = tpu.matmul %82, %83, %cst_29 {dimension_numbers = #tpu.dot_dimension_numbers<[1], [0], [0], [1], [0, 0, 1, 1], [], []>} : vector<32x128xbf16>, vector<128x128xbf16>, vector<32x128xf32> -> vector<32x128xf32>
    %c0_30 = arith.constant 0 : index
    %c0_31 = arith.constant 0 : index
    %85 = vector.load %arg10[%c0_30, %c0_31] : memref<1x128xf32, #tpu.memory_space<vmem>>, vector<1x128xf32>
    %86 = vector.broadcast %85 : vector<1x128xf32> to vector<32x128xf32>
    %87 = arith.mulf %84, %86 : vector<32x128xf32>
    %c0_32 = arith.constant 0 : index
    %c0_33 = arith.constant 0 : index
    %88 = vector.load %arg11[%c0_32, %c0_33] : memref<1x128xf32, #tpu.memory_space<vmem>>, vector<1x128xf32>
    %89 = vector.broadcast %88 : vector<1x128xf32> to vector<32x128xf32>
    %90 = arith.addf %87, %89 : vector<32x128xf32>
    %91 = vector.extract_strided_slice %1 {offsets = [8, 0], sizes = [32, 128], strides = [1, 1]} : vector<48x128xbf16> to vector<32x128xbf16>
    %92 = arith.extf %91 : vector<32x128xbf16> to vector<32x128xf32>
    %93 = arith.addf %90, %92 : vector<32x128xf32>
    %cst_34 = arith.constant 0.000000e+00 : f32
    %94 = vector.broadcast %cst_34 : f32 to vector<32x128xf32>
    %95 = arith.maximumf %93, %94 : vector<32x128xf32>
    %96 = arith.truncf %95 : vector<32x128xf32> to vector<32x128xbf16>
    %c0_35 = arith.constant 0 : index
    %c0_36 = arith.constant 0 : index
    %c0_37 = arith.constant 0 : index
    %97 = vector.load %arg12[%c0_35, %c0_36, %c0_37] : memref<1x32x128xbf16, #tpu.memory_space<vmem>>, vector<1x32x128xbf16>
    %98 = vector.shape_cast %97 : vector<1x32x128xbf16> to vector<32x128xbf16>
    %99 = vector.shape_cast %96 : vector<32x128xbf16> to vector<1x32x128xbf16>
    tpu.vector_store %arg12[%c0_35, %c0_36, %c0_37], %99 {strides = array<i32>} : memref<1x32x128xbf16, #tpu.memory_space<vmem>>, vector<1x32x128xbf16>,
    return
  }
  func.func @transform_0(%arg0: i32, %arg1: i32) -> (i32, i32, i32, i32) {
    %c0_i32 = arith.constant 0 : i32
    %c0_i32_0 = arith.constant 0 : i32
    %c0_i32_1 = arith.constant 0 : i32
    return %arg0, %arg1, %c0_i32, %c0_i32_0 : i32, i32, i32, i32
  }
  func.func @transform_1(%arg0: i32, %arg1: i32) -> (i32, i32) {
    %c0_i32 = arith.constant 0 : i32
    %c0_i32_0 = arith.constant 0 : i32
    %c0_i32_1 = arith.constant 0 : i32
    return %c0_i32, %c0_i32_0 : i32, i32
  }
  func.func @transform_2(%arg0: i32, %arg1: i32) -> (i32, i32) {
    %c0_i32 = arith.constant 0 : i32
    %c0_i32_0 = arith.constant 0 : i32
    %c0_i32_1 = arith.constant 0 : i32
    return %c0_i32, %c0_i32_0 : i32, i32
  }
  func.func @transform_3(%arg0: i32, %arg1: i32) -> (i32, i32) {
    %c0_i32 = arith.constant 0 : i32
    %c0_i32_0 = arith.constant 0 : i32
    %c0_i32_1 = arith.constant 0 : i32
    return %c0_i32, %c0_i32_0 : i32, i32
  }
  func.func @transform_4(%arg0: i32, %arg1: i32) -> (i32, i32) {
    %c0_i32 = arith.constant 0 : i32
    %c0_i32_0 = arith.constant 0 : i32
    %c0_i32_1 = arith.constant 0 : i32
    return %c0_i32, %c0_i32_0 : i32, i32
  }
  func.func @transform_5(%arg0: i32, %arg1: i32) -> (i32, i32) {
    %c0_i32 = arith.constant 0 : i32
    %c0_i32_0 = arith.constant 0 : i32
    %c0_i32_1 = arith.constant 0 : i32
    return %c0_i32, %c0_i32_0 : i32, i32
  }
  func.func @transform_6(%arg0: i32, %arg1: i32) -> (i32, i32) {
    %c0_i32 = arith.constant 0 : i32
    %c0_i32_0 = arith.constant 0 : i32
    %c0_i32_1 = arith.constant 0 : i32
    return %c0_i32, %c0_i32_0 : i32, i32
  }
  func.func @transform_7(%arg0: i32, %arg1: i32) -> (i32, i32) {
    %c0_i32 = arith.constant 0 : i32
    %c0_i32_0 = arith.constant 0 : i32
    %c0_i32_1 = arith.constant 0 : i32
    return %c0_i32, %c0_i32_0 : i32, i32
  }
  func.func @transform_8(%arg0: i32, %arg1: i32) -> (i32, i32) {
    %c0_i32 = arith.constant 0 : i32
    %c0_i32_0 = arith.constant 0 : i32
    %c0_i32_1 = arith.constant 0 : i32
    return %c0_i32, %c0_i32_0 : i32, i32
  }
  func.func @transform_9(%arg0: i32, %arg1: i32) -> (i32, i32) {
    %c0_i32 = arith.constant 0 : i32
    %c0_i32_0 = arith.constant 0 : i32
    %c0_i32_1 = arith.constant 0 : i32
    return %c0_i32, %c0_i32_0 : i32, i32
  }
  func.func @transform_10(%arg0: i32, %arg1: i32) -> (i32, i32, i32) {
    %c0_i32 = arith.constant 0 : i32
    %c0_i32_0 = arith.constant 0 : i32
    return %arg0, %arg1, %c0_i32 : i32, i32, i32
  }
}

</mosaic_0001>

<llo_original>
// kernel: tpu_custom_call.1
$region0: #{tpu_custom_call.1}
  #allocation0 [shape = 'u32[]', space=smem, size = 0x4, offset = 0x4, fixed_abs, tag = 'smem constant byte address 0x4 - core index']
  #allocation1 [shape = 'u32[144,128]{1,0:T(1,128)}', space=vmem, size = 0x12000, scoped, tag = 'internal scratch']
  %s0 = inlined_call_operand.hbm [shape: bf16[2,2,48,128], index: 0, kind: input, shape index: {}]
  %s1 = inlined_call_operand.hbm [shape: bf16[128,128], index: 1, kind: input, shape index: {}]
  %s2 = inlined_call_operand.hbm [shape: bf16[1152,128], index: 2, kind: input, shape index: {}]
  %s3 = inlined_call_operand.hbm [shape: bf16[128,128], index: 3, kind: input, shape index: {}]
  %s4 = inlined_call_operand.vmem [shape: f32[1,128], index: 4, kind: input, shape index: {}]
  %s5 = inlined_call_operand.vmem [shape: f32[1,128], index: 5, kind: input, shape index: {}]
  %s6 = inlined_call_operand.vmem [shape: f32[1,128], index: 6, kind: input, shape index: {}]
  %s7 = inlined_call_operand.vmem [shape: f32[1,128], index: 7, kind: input, shape index: {}]
  %s8 = inlined_call_operand.vmem [shape: f32[1,128], index: 8, kind: input, shape index: {}]
  %s9 = inlined_call_operand.vmem [shape: f32[1,128], index: 9, kind: input, shape index: {}]
  %s10 = inlined_call_operand.hbm [shape: bf16[2,64,128], index: 10, kind: output, shape index: {}]
  %s11 = sld [smem:[#allocation0]]
  $region89: #{tpu_custom_call.1} parent=0
    _
  %s13 = ssub.s32 1, %s11
  %s14 = scalar_select 0, %s13, %s11
  $region1: #{tpu_custom_call.1} parent=0
    #allocation2 [shape = 'u8[24576]{0}', space=vmem, size = 0x6000, scoped, tag = 'input window, operand 0']
    #allocation3 [shape = 's32[2]{0}', space=sflag, size = 0x8, scoped, tag = 'scoped memory for tpu_custom_call.1']
    #allocation4 [shape = 's32[2]{0}', space=sflag, size = 0x8, scoped, tag = 'scoped memory for tpu_custom_call.1']
    #allocation5 [shape = 'u8[32768]{0}', space=vmem, size = 0x8000, scoped, tag = 'input window, operand 1, single buffered']
    #allocation6 [shape = 's32[1]{0}', space=sflag, size = 0x4, scoped, tag = 'scoped memory for tpu_custom_call.1']
    #allocation7 [shape = 'u8[294912]{0}', space=vmem, size = 0x48000, scoped, tag = 'input window, operand 2, single buffered']
    #allocation8 [shape = 'u8[32768]{0}', space=vmem, size = 0x8000, scoped, tag = 'input window, operand 3, single buffered']
    #allocation9 [shape = 's32[1]{0}', space=sflag, size = 0x4, scoped, tag = 'scoped memory for tpu_custom_call.1']
    #allocation10 [shape = 'u8[16384]{0}', space=vmem, size = 0x4000, scoped, tag = 'output window, operand 0']
    %15 = vsyncpa [#allocation3], 0
    %s16 = scalar_lea.sflag [#allocation3], 1
    %17 = vsyncpa %s16, 0
    %18 = vsyncpa [#allocation6], 0
    %19 = vsyncpa [#allocation9], 0
    %20 = vsyncpa [#allocation4], 0
    %s21 = scalar_lea.sflag [#allocation4], 1
    %22 = vsyncpa %s21, 0
    loop: start=0, step=1, limit=6
    $region2: #{tpu_custom_call.1} parent=1 // loop_pre_header
      _
    $region3: #{tpu_custom_call.1} parent=1 // loop_header
      %s24 = sphi 0, %s28
      %p25 = scmp.ge.s32.totalorder %s24, 6
      %s31 = sphi 0, %s43
      %s32 = sphi 0, %s39
      %s33 = sphi 0, %s31
      %s34 = sphi 0, %s32
      %s35 = sphi 0, %s33
      %s36 = sphi 0, %s34
      %s48 = sphi 0, %s50
      %s51 = sphi 0, %s48
      %s52 = sphi 0, %s51
      %s68 = sphi 0, %s52
      %s72 = sphi 0, %s72
      %s74 = sphi 0, %s72
      %s75 = sphi 0, %s74
      %s89 = sphi 0, %s75
      %s93 = sphi 0, %s93
      %s95 = sphi 0, %s93
      %s96 = sphi 0, %s95
      %s110 = sphi 0, %s96
      %s114 = sphi 0, %s114
      %s116 = sphi 0, %s114
      %s117 = sphi 0, %s116
      %s131 = sphi 0, %s117
      %s135 = sphi 0, %s135
      %s137 = sphi 0, %s135
      %s138 = sphi 0, %s137
      %s152 = sphi 0, %s138
      %s156 = sphi 0, %s156
      %s158 = sphi 0, %s156
      %s159 = sphi 0, %s158
      %s173 = sphi 0, %s159
      %s177 = sphi 0, %s177
      %s179 = sphi 0, %s177
      %s180 = sphi 0, %s179
      %s194 = sphi 0, %s180
      %s198 = sphi 0, %s198
      %s200 = sphi 0, %s198
      %s201 = sphi 0, %s200
      %s215 = sphi 0, %s201
      %s219 = sphi 0, %s219
      %s221 = sphi 0, %s219
      %s222 = sphi 0, %s221
      %s236 = sphi 0, %s222
      %s240 = sphi 0, %s240
      %s242 = sphi 0, %s240
      %s243 = sphi 0, %s242
      %s257 = sphi 0, %s243
      %s265 = sphi 0, %s267
      %s268 = sphi 0, %s265
      %s269 = sphi 0, %s268
      %s285 = sphi 0, %s269
    $region4: #{tpu_custom_call.1} parent=1 // loop_header_branch
      %27 = sbr.rel (%p25) target = $region8
    $region5: #{tpu_custom_call.1} parent=1 // loop_body
      %s29 = ssub.s32 %s24, 1
      %s30 = ssub.s32 %s24, 2
      %s37 = sadd.s32 1, %s32
      %p38 = scmp.ge.s32.totalorder %s37, 2
      %s39 = scalar_select %p38, 0, %s37
      %s40 = sadd.s32 1, %s31
      %s41 = scalar_select %p38, %s40, %s31
      %p42 = scmp.ge.s32.totalorder %s41, 2
      %s43 = scalar_select %p42, 0, %s41
      %s44 = ssub.s32 %s31, %s43
      %s45 = ssub.s32 %s32, %s39
      %s46 = sor.u32 %s44, %s45
      %p47 = scmp.eq.s32.totalorder %s46, 0
      %s49 = sadd.s32 %s48, 1
      %s50 = scalar_select %p47, %s48, %s49
      %p53 = pneg %p47
      %p54 = scmp.eq.s32.totalorder %s24, 3
      %p55 = por %p53, %p54
      %p56 = scmp.ne.s32.totalorder %s48, %s51
      %p57 = scmp.eq.s32.totalorder %s24, 0
      %p58 = por %p56, %p57
      %p59 = scmp.ne.s32.totalorder %s48, %s51
      %p60 = scmp.eq.s32.totalorder %s29, 3
      %p61 = por %p59, %p60
      %p62 = scmp.ne.s32.totalorder %s51, %s52
      %p63 = scmp.eq.s32.totalorder %s29, 0
      %p64 = por %p62, %p63
      %p65 = scmp.ne.s32.totalorder %s51, %s52
      %p66 = scmp.eq.s32.totalorder %s30, 3
      %p67 = por %p65, %p66
      %p69 = scmp.ne.s32.totalorder %s52, %s68
      %p70 = scmp.eq.s32.totalorder %s30, 0
      %p71 = por %p69, %p70
      %s73 = sadd.s32 %s72, 1
      %p76 = scmp.eq.s32.totalorder %s24, 3
      %p77 = scmp.ne.s32.totalorder %s72, %s74
      %p78 = scmp.eq.s32.totalorder %s24, 0
      %p79 = por %p77, %p78
      %p80 = scmp.ne.s32.totalorder %s72, %s74
      %p81 = scmp.eq.s32.totalorder %s29, 3
      %p82 = por %p80, %p81
      %p83 = scmp.ne.s32.totalorder %s74, %s75
      %p84 = scmp.eq.s32.totalorder %s29, 0
      %p85 = por %p83, %p84
      %p86 = scmp.ne.s32.totalorder %s74, %s75
      %p87 = scmp.eq.s32.totalorder %s30, 3
      %p88 = por %p86, %p87
      %p90 = scmp.ne.s32.totalorder %s75, %s89
      %p91 = scmp.eq.s32.totalorder %s30, 0
      %p92 = por %p90, %p91
      %s94 = sadd.s32 %s93, 1
      %p97 = scmp.eq.s32.totalorder %s24, 3
      %p98 = scmp.ne.s32.totalorder %s93, %s95
      %p99 = scmp.eq.s32.totalorder %s24, 0
      %p100 = por %p98, %p99
      %p101 = scmp.ne.s32.totalorder %s93, %s95
      %p102 = scmp.eq.s32.totalorder %s29, 3
      %p103 = por %p101, %p102
      %p104 = scmp.ne.s32.totalorder %s95, %s96
      %p105 = scmp.eq.s32.totalorder %s29, 0
      %p106 = por %p104, %p105
      %p107 = scmp.ne.s32.totalorder %s95, %s96
      %p108 = scmp.eq.s32.totalorder %s30, 3
      %p109 = por %p107, %p108
      %p111 = scmp.ne.s32.totalorder %s96, %s110
      %p112 = scmp.eq.s32.totalorder %s30, 0
      %p113 = por %p111, %p112
      %s115 = sadd.s32 %s114, 1
      %p118 = scmp.eq.s32.totalorder %s24, 3
      %p119 = scmp.ne.s32.totalorder %s114, %s116
      %p120 = scmp.eq.s32.totalorder %s24, 0
      %p121 = por %p119, %p120
      %p122 = scmp.ne.s32.totalorder %s114, %s116
      %p123 = scmp.eq.s32.totalorder %s29, 3
      %p124 = por %p122, %p123
      %p125 = scmp.ne.s32.totalorder %s116, %s117
      %p126 = scmp.eq.s32.totalorder %s29, 0
      %p127 = por %p125, %p126
      %p128 = scmp.ne.s32.totalorder %s116, %s117
      %p129 = scmp.eq.s32.totalorder %s30, 3
      %p130 = por %p128, %p129
      %p132 = scmp.ne.s32.totalorder %s117, %s131
      %p133 = scmp.eq.s32.totalorder %s30, 0
      %p134 = por %p132, %p133
      %s136 = sadd.s32 %s135, 1
      %p139 = scmp.eq.s32.totalorder %s24, 3
      %p140 = scmp.ne.s32.totalorder %s135, %s137
      %p141 = scmp.eq.s32.totalorder %s24, 0
      %p142 = por %p140, %p141
      %p143 = scmp.ne.s32.totalorder %s135, %s137
      %p144 = scmp.eq.s32.totalorder %s29, 3
      %p145 = por %p143, %p144
      %p146 = scmp.ne.s32.totalorder %s137, %s138
      %p147 = scmp.eq.s32.totalorder %s29, 0
      %p148 = por %p146, %p147
      %p149 = scmp.ne.s32.totalorder %s137, %s138
      %p150 = scmp.eq.s32.totalorder %s30, 3
      %p151 = por %p149, %p150
      %p153 = scmp.ne.s32.totalorder %s138, %s152
      %p154 = scmp.eq.s32.totalorder %s30, 0
      %p155 = por %p153, %p154
      %s157 = sadd.s32 %s156, 1
      %p160 = scmp.eq.s32.totalorder %s24, 3
      %p161 = scmp.ne.s32.totalorder %s156, %s158
      %p162 = scmp.eq.s32.totalorder %s24, 0
      %p163 = por %p161, %p162
      %p164 = scmp.ne.s32.totalorder %s156, %s158
      %p165 = scmp.eq.s32.totalorder %s29, 3
      %p166 = por %p164, %p165
      %p167 = scmp.ne.s32.totalorder %s158, %s159
      %p168 = scmp.eq.s32.totalorder %s29, 0
      %p169 = por %p167, %p168
      %p170 = scmp.ne.s32.totalorder %s158, %s159
      %p171 = scmp.eq.s32.totalorder %s30, 3
      %p172 = por %p170, %p171
      %p174 = scmp.ne.s32.totalorder %s159, %s173
      %p175 = scmp.eq.s32.totalorder %s30, 0
      %p176 = por %p174, %p175
      %s178 = sadd.s32 %s177, 1
      %p181 = scmp.eq.s32.totalorder %s24, 3
      %p182 = scmp.ne.s32.totalorder %s177, %s179
      %p183 = scmp.eq.s32.totalorder %s24, 0
      %p184 = por %p182, %p183
      %p185 = scmp.ne.s32.totalorder %s177, %s179
      %p186 = scmp.eq.s32.totalorder %s29, 3
      %p187 = por %p185, %p186
      %p188 = scmp.ne.s32.totalorder %s179, %s180
      %p189 = scmp.eq.s32.totalorder %s29, 0
      %p190 = por %p188, %p189
      %p191 = scmp.ne.s32.totalorder %s179, %s180
      %p192 = scmp.eq.s32.totalorder %s30, 3
      %p193 = por %p191, %p192
      %p195 = scmp.ne.s32.totalorder %s180, %s194
      %p196 = scmp.eq.s32.totalorder %s30, 0
      %p197 = por %p195, %p196
      %s199 = sadd.s32 %s198, 1
      %p202 = scmp.eq.s32.totalorder %s24, 3
      %p203 = scmp.ne.s32.totalorder %s198, %s200
      %p204 = scmp.eq.s32.totalorder %s24, 0
      %p205 = por %p203, %p204
      %p206 = scmp.ne.s32.totalorder %s198, %s200
      %p207 = scmp.eq.s32.totalorder %s29, 3
      %p208 = por %p206, %p207
      %p209 = scmp.ne.s32.totalorder %s200, %s201
      %p210 = scmp.eq.s32.totalorder %s29, 0
      %p211 = por %p209, %p210
      %p212 = scmp.ne.s32.totalorder %s200, %s201
      %p213 = scmp.eq.s32.totalorder %s30, 3
      %p214 = por %p212, %p213
      %p216 = scmp.ne.s32.totalorder %s201, %s215
      %p217 = scmp.eq.s32.totalorder %s30, 0
      %p218 = por %p216, %p217
      %s220 = sadd.s32 %s219, 1
      %p223 = scmp.eq.s32.totalorder %s24, 3
      %p224 = scmp.ne.s32.totalorder %s219, %s221
      %p225 = scmp.eq.s32.totalorder %s24, 0
      %p226 = por %p224, %p225
      %p227 = scmp.ne.s32.totalorder %s219, %s221
      %p228 = scmp.eq.s32.totalorder %s29, 3
      %p229 = por %p227, %p228
      %p230 = scmp.ne.s32.totalorder %s221, %s222
      %p231 = scmp.eq.s32.totalorder %s29, 0
      %p232 = por %p230, %p231
      %p233 = scmp.ne.s32.totalorder %s221, %s222
      %p234 = scmp.eq.s32.totalorder %s30, 3
      %p235 = por %p233, %p234
      %p237 = scmp.ne.s32.totalorder %s222, %s236
      %p238 = scmp.eq.s32.totalorder %s30, 0
      %p239 = por %p237, %p238
      %s241 = sadd.s32 %s240, 1
      %p244 = scmp.eq.s32.totalorder %s24, 3
      %p245 = scmp.ne.s32.totalorder %s240, %s242
      %p246 = scmp.eq.s32.totalorder %s24, 0
      %p247 = por %p245, %p246
      %p248 = scmp.ne.s32.totalorder %s240, %s242
      %p249 = scmp.eq.s32.totalorder %s29, 3
      %p250 = por %p248, %p249
      %p251 = scmp.ne.s32.totalorder %s242, %s243
      %p252 = scmp.eq.s32.totalorder %s29, 0
      %p253 = por %p251, %p252
      %p254 = scmp.ne.s32.totalorder %s242, %s243
      %p255 = scmp.eq.s32.totalorder %s30, 3
      %p256 = por %p254, %p255
      %p258 = scmp.ne.s32.totalorder %s243, %s257
      %p259 = scmp.eq.s32.totalorder %s30, 0
      %p260 = por %p258, %p259
      %s261 = ssub.s32 %s31, %s43
      %s262 = ssub.s32 %s32, %s39
      %s263 = sor.u32 %s261, %s262
      %p264 = scmp.eq.s32.totalorder %s263, 0
      %s266 = sadd.s32 %s265, 1
      %s267 = scalar_select %p264, %s265, %s266
      %p270 = pneg %p264
      %p271 = scmp.eq.s32.totalorder %s24, 3
      %p272 = por %p270, %p271
      %p273 = scmp.ne.s32.totalorder %s265, %s268
      %p274 = scmp.eq.s32.totalorder %s24, 0
      %p275 = por %p273, %p274
      %p276 = scmp.ne.s32.totalorder %s265, %s268
      %p277 = scmp.eq.s32.totalorder %s29, 3
      %p278 = por %p276, %p277
      %p279 = scmp.ne.s32.totalorder %s268, %s269
      %p280 = scmp.eq.s32.totalorder %s29, 0
      %p281 = por %p279, %p280
      %p282 = scmp.ne.s32.totalorder %s268, %s269
      %p283 = scmp.eq.s32.totalorder %s30, 3
      %p284 = por %p282, %p283
      %p286 = scmp.ne.s32.totalorder %s269, %s285
      %p287 = scmp.eq.s32.totalorder %s30, 0
      %p288 = por %p286, %p287
      %p289 = scmp.le.s32.totalorder 1, %s24
      %p290 = scmp.lt.s32.totalorder %s24, 5
      %p291 = pnand %p289, %p290
      %p292 = pneg %p291
      // Predicated region
      $region9: #{tpu_custom_call.1} parent=5 // pred_check
        _
      $region10: #{tpu_custom_call.1} parent=5 // pred_check_branch
        %294 = sbr.rel (%p291) target = $region12
      $region11: #{tpu_custom_call.1} parent=5 // pred_region
        %s295 = ssub.s32 %s24, 1
        // Predicated region
        $region13: #{tpu_custom_call.1} parent=11 // pred_check
          %p296 = pneg %p85
        $region14: #{tpu_custom_call.1} parent=11 // pred_check_branch
          %298 = sbr.rel (%p296) target = $region16
        $region15: #{tpu_custom_call.1} parent=11 // pred_region
          %s300 = ssub.s32 1024, 1024
          %301 = vsyncadd [#allocation6], %s300
          %s302 = sshll.u32 [#allocation5], 4
          %s303 = int_to_ptr.vmem [resolvable:$true] %s302
          %308 = dma.hbm_to_vmem [thread:$0]  %s1, 1024, %s303, [#allocation6], 64, 64, 4
        $region16: #{tpu_custom_call.1} parent=11 // pred_fallthru
          _
        // Predicated region
        $region17: #{tpu_custom_call.1} parent=11 // pred_check
          %p309 = pneg %p106
        $region18: #{tpu_custom_call.1} parent=11 // pred_check_branch
          %311 = sbr.rel (%p309) target = $region20
        $region19: #{tpu_custom_call.1} parent=11 // pred_region
          %s313 = ssub.s32 9216, 9216
          %314 = vsyncadd [#allocation6], %s313
          %s315 = sshll.u32 [#allocation7], 4
          %s316 = int_to_ptr.vmem [resolvable:$true] %s315
          %321 = dma.hbm_to_vmem [thread:$0]  %s2, 9216, %s316, [#allocation6], 64, 64, 4
        $region20: #{tpu_custom_call.1} parent=11 // pred_fallthru
          _
        // Predicated region
        $region21: #{tpu_custom_call.1} parent=11 // pred_check
          %p322 = pneg %p127
        $region22: #{tpu_custom_call.1} parent=11 // pred_check_branch
          %324 = sbr.rel (%p322) target = $region24
        $region23: #{tpu_custom_call.1} parent=11 // pred_region
          %s326 = ssub.s32 1024, 1024
          %327 = vsyncadd [#allocation9], %s326
          %s328 = sshll.u32 [#allocation8], 4
          %s329 = int_to_ptr.vmem [resolvable:$true] %s328
          %334 = dma.hbm_to_vmem [thread:$0]  %s3, 1024, %s329, [#allocation9], 64, 64, 4
        $region24: #{tpu_custom_call.1} parent=11 // pred_fallthru
          _
        // Predicated region
        $region25: #{tpu_custom_call.1} parent=11 // pred_check
          %p335 = pneg %p148
        $region26: #{tpu_custom_call.1} parent=11 // pred_check_branch
          %337 = sbr.rel (%p335) target = $region28
        $region27: #{tpu_custom_call.1} parent=11 // pred_region
          _
        $region28: #{tpu_custom_call.1} parent=11 // pred_fallthru
          _
        // Predicated region
        $region29: #{tpu_custom_call.1} parent=11 // pred_check
          %p338 = pneg %p169
        $region30: #{tpu_custom_call.1} parent=11 // pred_check_branch
          %340 = sbr.rel (%p338) target = $region32
        $region31: #{tpu_custom_call.1} parent=11 // pred_region
          _
        $region32: #{tpu_custom_call.1} parent=11 // pred_fallthru
          _
        // Predicated region
        $region33: #{tpu_custom_call.1} parent=11 // pred_check
          %p341 = pneg %p190
        $region34: #{tpu_custom_call.1} parent=11 // pred_check_branch
          %343 = sbr.rel (%p341) target = $region36
        $region35: #{tpu_custom_call.1} parent=11 // pred_region
          _
        $region36: #{tpu_custom_call.1} parent=11 // pred_fallthru
          _
        // Predicated region
        $region37: #{tpu_custom_call.1} parent=11 // pred_check
          %p344 = pneg %p211
        $region38: #{tpu_custom_call.1} parent=11 // pred_check_branch
          %346 = sbr.rel (%p344) target = $region40
        $region39: #{tpu_custom_call.1} parent=11 // pred_region
          _
        $region40: #{tpu_custom_call.1} parent=11 // pred_fallthru
          _
        // Predicated region
        $region41: #{tpu_custom_call.1} parent=11 // pred_check
          %p347 = pneg %p232
        $region42: #{tpu_custom_call.1} parent=11 // pred_check_branch
          %349 = sbr.rel (%p347) target = $region44
        $region43: #{tpu_custom_call.1} parent=11 // pred_region
          _
        $region44: #{tpu_custom_call.1} parent=11 // pred_fallthru
          _
        // Predicated region
        $region45: #{tpu_custom_call.1} parent=11 // pred_check
          %p350 = pneg %p253
        $region46: #{tpu_custom_call.1} parent=11 // pred_check_branch
          %352 = sbr.rel (%p350) target = $region48
        $region47: #{tpu_custom_call.1} parent=11 // pred_region
          _
        $region48: #{tpu_custom_call.1} parent=11 // pred_fallthru
          _
      $region12: #{tpu_custom_call.1} parent=5 // pred_fallthru
        _
      %p353 = scmp.lt.s32.totalorder %s24, 4
      // Predicated region
      $region49: #{tpu_custom_call.1} parent=5 // pred_check
        %p354 = pneg %p353
      $region50: #{tpu_custom_call.1} parent=5 // pred_check_branch
        %356 = sbr.rel (%p354) target = $region52
      $region51: #{tpu_custom_call.1} parent=5 // pred_region
        // Predicated region
        $region53: #{tpu_custom_call.1} parent=51 // pred_check
          %p357 = pneg %p58
        $region54: #{tpu_custom_call.1} parent=51 // pred_check_branch
          %359 = sbr.rel (%p357) target = $region56
        $region55: #{tpu_custom_call.1} parent=51 // pred_region
          %s360 = sand.u32 %s48, 1
          %s361 = scalar_lea.sflag [#allocation3], %s360
          %s362 = sand.u32 %s48, 1
          %s363 = smul.addr %s362, 24
          %s364 = scalar_lea.vmem [#allocation2], %s363
          %s366 = ssub.s32 384, 384
          %367 = vsyncadd %s361, %s366
          %s368 = smul.addr %s32, 6
          %s369 = smul.addr %s31, 12
          %s370 = sadd.s32 %s368, %s369
          %s371 = smul.addr %s370, 64
          %s372 = scalar_lea.hbm %s0, %s371
          %s373 = sshll.u32 %s364, 4
          %s374 = int_to_ptr.vmem [resolvable:$true] %s373
          %379 = dma.hbm_to_vmem [thread:$0]  %s372, 384, %s374, %s361, 64, 64, 4
        $region56: #{tpu_custom_call.1} parent=51 // pred_fallthru
          _
      $region52: #{tpu_custom_call.1} parent=5 // pred_fallthru
        _
      %p380 = scmp.le.s32.totalorder 1, %s24
      %p381 = scmp.lt.s32.totalorder %s24, 5
      %p382 = pnand %p380, %p381
      %p383 = pneg %p382
      // Predicated region
      $region57: #{tpu_custom_call.1} parent=5 // pred_check
        _
      $region58: #{tpu_custom_call.1} parent=5 // pred_check_branch
        %385 = sbr.rel (%p382) target = $region60
      $region59: #{tpu_custom_call.1} parent=5 // pred_region
        %s386 = ssub.s32 %s24, 1
        %s387 = sand.u32 %s51, 1
        %s388 = scalar_lea.sflag [#allocation3], %s387
        %s389 = sand.u32 %s51, 1
        %s390 = smul.addr %s389, 24
        %s391 = scalar_lea.vmem [#allocation2], %s390
        // Predicated region
        $region61: #{tpu_custom_call.1} parent=59 // pred_check
          %p392 = pneg %p64
        $region62: #{tpu_custom_call.1} parent=59 // pred_check_branch
          %394 = sbr.rel (%p392) target = $region64
        $region63: #{tpu_custom_call.1} parent=59 // pred_region
          %395 = dma.done %s388, 384
        $region64: #{tpu_custom_call.1} parent=59 // pred_fallthru
          _
        // Predicated region
        $region65: #{tpu_custom_call.1} parent=59 // pred_check
          %p396 = pneg %p85
        $region66: #{tpu_custom_call.1} parent=59 // pred_check_branch
          %398 = sbr.rel (%p396) target = $region68
        $region67: #{tpu_custom_call.1} parent=59 // pred_region
          %399 = dma.done [#allocation6], 1024
        $region68: #{tpu_custom_call.1} parent=59 // pred_fallthru
          _
        // Predicated region
        $region69: #{tpu_custom_call.1} parent=59 // pred_check
          %p400 = pneg %p106
        $region70: #{tpu_custom_call.1} parent=59 // pred_check_branch
          %402 = sbr.rel (%p400) target = $region72
        $region71: #{tpu_custom_call.1} parent=59 // pred_region
          %403 = dma.done [#allocation6], 9216
        $region72: #{tpu_custom_call.1} parent=59 // pred_fallthru
          _
        // Predicated region
        $region73: #{tpu_custom_call.1} parent=59 // pred_check
          %p404 = pneg %p127
        $region74: #{tpu_custom_call.1} parent=59 // pred_check_branch
          %406 = sbr.rel (%p404) target = $region76
        $region75: #{tpu_custom_call.1} parent=59 // pred_region
          %407 = dma.done [#allocation9], 1024
        $region76: #{tpu_custom_call.1} parent=59 // pred_fallthru
          _
        %s408 = sand.u32 %s51, 1
        %s409 = scalar_lea.sflag [#allocation3], %s408
        %s410 = sand.u32 %s51, 1
        %s411 = smul.addr %s410, 24
        %s412 = scalar_lea.vmem [#allocation2], %s411
        %p413 = pneg %p64
        %p414 = pneg %p61
        %p415 = pneg %p85
        %p416 = pneg %p82
        %p417 = pneg %p106
        %p418 = pneg %p103
        %p419 = pneg %p127
        %p420 = pneg %p124
        %p421 = pneg %p148
        %p422 = pneg %p145
        %p423 = pneg %p169
        %p424 = pneg %p166
        %p425 = pneg %p190
        %p426 = pneg %p187
        %p427 = pneg %p211
        %p428 = pneg %p208
        %p429 = pneg %p232
        %p430 = pneg %p229
        %p431 = pneg %p253
        %p432 = pneg %p250
        %p433 = pneg %p281
        %p434 = pneg %p278
        %s435 = sand.u32 %s268, 1
        %s436 = scalar_lea.sflag [#allocation4], %s435
        %s437 = sand.u32 %s268, 1
        %s438 = smul.addr %s437, 16
        %s439 = scalar_lea.vmem [#allocation10], %s438
        %s440 = smul.u32 4, %s34
        %v442 = vld [vmem:[%s391] sm:$0xf]
        %v443 = vld [vmem:[%s391 + $0x4] sm:$0xf]
        %v444 = vld [vmem:[%s391 + $0x8] sm:$0xf]
        %v445 = vld [vmem:[%s391 + $0xc] sm:$0xf]
        %v446 = vld [vmem:[%s391 + $0x10] sm:$0xf]
        %v447 = vld [vmem:[%s391 + $0x14] sm:$0xf]
        %v448 = vld [vmem:[#allocation5] sm:$0xf]
        %v449 = vld [vmem:[#allocation5 + $0x4] sm:$0xf]
        %v450 = vld [vmem:[#allocation5 + $0x8] sm:$0xf]
        %v451 = vld [vmem:[#allocation5 + $0xc] sm:$0xf]
        %v452 = vld [vmem:[#allocation5 + $0x10] sm:$0xf]
        %v453 = vld [vmem:[#allocation5 + $0x14] sm:$0xf]
        %v454 = vld [vmem:[#allocation5 + $0x18] sm:$0xf]
        %v455 = vld [vmem:[#allocation5 + $0x1c] sm:$0xf]
        %v456 = vld [vmem:[#allocation5 + $0x20] sm:$0xf]
        %v457 = vld [vmem:[#allocation5 + $0x24] sm:$0xf]
        %v458 = vld [vmem:[#allocation5 + $0x28] sm:$0xf]
        %v459 = vld [vmem:[#allocation5 + $0x2c] sm:$0xf]
        %v460 = vld [vmem:[#allocation5 + $0x30] sm:$0xf]
        %v461 = vld [vmem:[#allocation5 + $0x34] sm:$0xf]
        %v462 = vld [vmem:[#allocation5 + $0x38] sm:$0xf]
        %v463 = vld [vmem:[#allocation5 + $0x3c] sm:$0xf]
        %v470 = vunpack.c.l.b16 %v442
        %v471 = vunpack.c.l.b16 %v443
        %v472 = vunpack.c.l.b16 %v444
        %v473 = vunpack.c.l.b16 %v445
        %v474 = vunpack.c.l.b16 %v446
        %v475 = vunpack.c.l.b16 %v447
        %v476 = vpack.c.b16 %v471, %v470
        %v477 = vpack.c.b16 %v473, %v472
        %v478 = vpack.c.b16 %v475, %v474
        %v498 = vunpack.c.l.b16 %v448
        %v499 = vunpack.c.l.b16 %v449
        %v500 = vunpack.c.l.b16 %v450
        %v501 = vunpack.c.l.b16 %v451
        %v502 = vunpack.c.l.b16 %v452
        %v503 = vunpack.c.l.b16 %v453
        %v504 = vunpack.c.l.b16 %v454
        %v505 = vunpack.c.l.b16 %v455
        %v506 = vunpack.c.l.b16 %v456
        %v507 = vunpack.c.l.b16 %v457
        %v508 = vunpack.c.l.b16 %v458
        %v509 = vunpack.c.l.b16 %v459
        %v510 = vunpack.c.l.b16 %v460
        %v511 = vunpack.c.l.b16 %v461
        %v512 = vunpack.c.l.b16 %v462
        %v513 = vunpack.c.l.b16 %v463
        %v514 = vpack.c.b16 %v499, %v498
        %v515 = vpack.c.b16 %v501, %v500
        %v516 = vpack.c.b16 %v503, %v502
        %v517 = vpack.c.b16 %v505, %v504
        %v518 = vpack.c.b16 %v507, %v506
        %v519 = vpack.c.b16 %v509, %v508
        %v520 = vpack.c.b16 %v511, %v510
        %v521 = vpack.c.b16 %v513, %v512
        %530 = vmatprep.subr.bf16.mxu0 0
        %531 = vmatpush1.bf16.msra.mxu0 %v521
        %532 = vmatprep.subr.bf16.mxu0 0
        %533 = vmatpush1.bf16.msra.mxu0 %v520
        %534 = vmatprep.subr.bf16.mxu0 0
        %535 = vmatpush1.bf16.msra.mxu0 %v519
        %536 = vmatprep.subr.bf16.mxu0 0
        %537 = vmatpush1.bf16.msra.mxu0 %v518
        %538 = vmatprep.subr.bf16.mxu0 0
        %539 = vmatpush1.bf16.msra.mxu0 %v517
        %540 = vmatprep.subr.bf16.mxu0 0
        %541 = vmatpush1.bf16.msra.mxu0 %v516
        %542 = vmatprep.subr.bf16.mxu0 0
        %543 = vmatpush1.bf16.msra.mxu0 %v515
        %544 = vmatprep.subr.bf16.mxu0 0
        %545 = vmatpush1.bf16.msra.mxu0 %v514
        %546 = vmatprep.subr.bf16.mxu0 0
        %547 = vmatpush2.bf16.msra.mxu0 0
        %548 = vmatprep.subr.bf16.mxu0 0
        %549 = vmatpush2.bf16.msra.mxu0 0
        %550 = vmatprep.subr.bf16.mxu0 0
        %551 = vmatpush2.bf16.msra.mxu0 0
        %552 = vmatprep.subr.bf16.mxu0 0
        %553 = vmatpush2.bf16.msra.mxu0 0
        %554 = vmatprep.subr.bf16.mxu0 0
        %555 = vmatpush2.bf16.msra.mxu0 0
        %556 = vmatprep.subr.bf16.mxu0 0
        %557 = vmatpush2.bf16.msra.mxu0 0
        %558 = vmatprep.subr.bf16.mxu0 0
        %559 = vmatpush2.bf16.msra.mxu0 0
        %560 = vmatprep.subr.bf16.mxu0 0
        %561 = vmatpush2.bf16.msra.mxu0 0
        %562 = vmatprep.mubr.bf16.mxu0 0
        %563 = vmatmul.mubr.bf16.gmra.mxu0 %v476
        %v564 = vpop.f32.mrf.mxu0
        %v565 = vadd.f32 0.0, %v564
        %v566 = vpop.f32.mrf.mxu0
        %v567 = vpop.f32.mrf.mxu0
        %v568 = vadd.f32 0.0, %v567
        %v569 = vpop.f32.mrf.mxu0
        %570 = vmatprep.mubr.bf16.mxu0 0
        %571 = vmatmul.mubr.bf16.gmra.mxu0 %v477
        %v572 = vpop.f32.mrf.mxu0
        %v573 = vadd.f32 0.0, %v572
        %v574 = vpop.f32.mrf.mxu0
        %v575 = vpop.f32.mrf.mxu0
        %v576 = vadd.f32 0.0, %v575
        %v577 = vpop.f32.mrf.mxu0
        %578 = vmatprep.mubr.bf16.mxu0 0
        %579 = vmatmul.mubr.bf16.gmra.mxu0 %v478
        %v580 = vpop.f32.mrf.mxu0
        %v581 = vadd.f32 0.0, %v580
        %v582 = vpop.f32.mrf.mxu0
        %v583 = vpop.f32.mrf.mxu0
        %v584 = vadd.f32 0.0, %v583
        %v585 = vpop.f32.mrf.mxu0
        %586 = vdwg.mxu0
        %v587 = vld [vmem:[%s4] sm:$0x1]
        %v589 = vlaneseq
        %v590 = vshrl.u32 %v589, 7
        %v591 = vsub.s32 0, %v590
        %v592 = vrot.slane %v587, %v591
        %v594 = vmul.f32 %v565, %v592
        %v595 = vmul.f32 %v568, %v592
        %v596 = vmul.f32 %v573, %v592
        %v597 = vmul.f32 %v576, %v592
        %v598 = vmul.f32 %v581, %v592
        %v599 = vmul.f32 %v584, %v592
        %v600 = vld [vmem:[%s5] sm:$0x1]
        %v602 = vlaneseq
        %v603 = vshrl.u32 %v602, 7
        %v604 = vsub.s32 0, %v603
        %v605 = vrot.slane %v600, %v604
        %v607 = vadd.f32 %v594, %v605
        %v608 = vadd.f32 %v595, %v605
        %v609 = vadd.f32 %v596, %v605
        %v610 = vadd.f32 %v597, %v605
        %v611 = vadd.f32 %v598, %v605
        %v612 = vadd.f32 %v599, %v605
        %v613 = vmax.f32 %v607, 0.0
        %v614 = vmax.f32 %v608, 0.0
        %v615 = vmax.f32 %v609, 0.0
        %v616 = vmax.f32 %v610, 0.0
        %v617 = vmax.f32 %v611, 0.0
        %v618 = vmax.f32 %v612, 0.0
        %v619 = vlaneseq
        %v620 = vshrl.u32 %v619, 7
        %v621 = vadd.s32 %v620, 8
        %v622 = vadd.s32 %v620, 16
        %v623 = vadd.s32 %v620, 24
        %v624 = vadd.s32 %v620, 32
        %v625 = vadd.s32 %v620, 40
        %vm626 = vcmp.lt.s32.totalorder %v620, 0
        %v627 = vsub.s32 0, %v620
        %v628 = vsel %vm626, %v627, %v620
        %v629 = vshrl.u32 %v628, 3
        %v630 = vand.u32 %v628, 7
        %v631 = vsub.s32 0, %v630
        %v632 = vsel %vm626, %v631, %v630
        %vm633 = vcmp.lt.s32.totalorder %v621, 0
        %v634 = vsub.s32 0, %v621
        %v635 = vsel %vm633, %v634, %v621
        %v636 = vshrl.u32 %v635, 3
        %v637 = vand.u32 %v635, 7
        %v638 = vsub.s32 0, %v637
        %v639 = vsel %vm633, %v638, %v637
        %vm640 = vcmp.lt.s32.totalorder %v622, 0
        %v641 = vsub.s32 0, %v622
        %v642 = vsel %vm640, %v641, %v622
        %v643 = vshrl.u32 %v642, 3
        %v644 = vand.u32 %v642, 7
        %v645 = vsub.s32 0, %v644
        %v646 = vsel %vm640, %v645, %v644
        %vm647 = vcmp.lt.s32.totalorder %v623, 0
        %v648 = vsub.s32 0, %v623
        %v649 = vsel %vm647, %v648, %v623
        %v650 = vshrl.u32 %v649, 3
        %v651 = vand.u32 %v649, 7
        %v652 = vsub.s32 0, %v651
        %v653 = vsel %vm647, %v652, %v651
        %vm654 = vcmp.lt.s32.totalorder %v624, 0
        %v655 = vsub.s32 0, %v624
        %v656 = vsel %vm654, %v655, %v624
        %v657 = vshrl.u32 %v656, 3
        %v658 = vand.u32 %v656, 7
        %v659 = vsub.s32 0, %v658
        %v660 = vsel %vm654, %v659, %v658
        %vm661 = vcmp.lt.s32.totalorder %v625, 0
        %v662 = vsub.s32 0, %v625
        %v663 = vsel %vm661, %v662, %v625
        %v664 = vshrl.u32 %v663, 3
        %v665 = vand.u32 %v663, 7
        %v666 = vsub.s32 0, %v665
        %v667 = vsel %vm661, %v666, %v665
        %vm668 = vcmp.ne.s32.totalorder %v632, 0
        %vm669 = vcmp.ne.s32.totalorder %v639, 0
        %vm670 = vcmp.ne.s32.totalorder %v646, 0
        %vm671 = vcmp.ne.s32.totalorder %v653, 0
        %vm672 = vcmp.ne.s32.totalorder %v660, 0
        %vm673 = vcmp.ne.s32.totalorder %v667, 0
        %vm674 = vcmp.lt.s32.totalorder %v632, 0
        %vm675 = vcmp.lt.s32.totalorder %v639, 0
        %vm676 = vcmp.lt.s32.totalorder %v646, 0
        %vm677 = vcmp.lt.s32.totalorder %v653, 0
        %vm678 = vcmp.lt.s32.totalorder %v660, 0
        %vm679 = vcmp.lt.s32.totalorder %v667, 0
        %vm680 = vmand %vm674, %vm668
        %vm681 = vmand %vm675, %vm669
        %vm682 = vmand %vm676, %vm670
        %vm683 = vmand %vm677, %vm671
        %vm684 = vmand %vm678, %vm672
        %vm685 = vmand %vm679, %vm673
        %v686 = vadd.s32 %v632, 8
        %v687 = vadd.s32 %v639, 8
        %v688 = vadd.s32 %v646, 8
        %v689 = vadd.s32 %v653, 8
        %v690 = vadd.s32 %v660, 8
        %v691 = vadd.s32 %v667, 8
        %v692 = vsel %vm680, %v686, %v632
        %v693 = vsel %vm681, %v687, %v639
        %v694 = vsel %vm682, %v688, %v646
        %v695 = vsel %vm683, %v689, %v653
        %v696 = vsel %vm684, %v690, %v660
        %v697 = vsel %vm685, %v691, %v667
        %vm698 = vcmp.lt.s32.totalorder %v620, 8
        %vm699 = vcmp.lt.s32.totalorder %v621, 8
        %vm700 = vcmp.lt.s32.totalorder %v622, 8
        %vm701 = vcmp.lt.s32.totalorder %v623, 8
        %vm702 = vcmp.lt.s32.totalorder %v624, 8
        %vm703 = vcmp.lt.s32.totalorder %v625, 8
        %p704 = scmp.eq.s32.totalorder %s34, 0
        %s705 = scalar_select %p704, 1, 0
        %v706 = vstv %s705
        %vm707 = vcmp.eq.s32.totalorder %v706, 1
        %vm708 = vmand %vm698, %vm707
        %vm709 = vmand %vm699, %vm707
        %vm710 = vmand %vm700, %vm707
        %vm711 = vmand %vm701, %vm707
        %vm712 = vmand %vm702, %vm707
        %vm713 = vmand %vm703, %vm707
        %vm714 = vcmp.ge.s32.totalorder %v620, 40
        %vm715 = vcmp.ge.s32.totalorder %v621, 40
        %vm716 = vcmp.ge.s32.totalorder %v622, 40
        %vm717 = vcmp.ge.s32.totalorder %v623, 40
        %vm718 = vcmp.ge.s32.totalorder %v624, 40
        %vm719 = vcmp.ge.s32.totalorder %v625, 40
        %p720 = scmp.eq.s32.totalorder %s34, 1
        %s721 = scalar_select %p720, 1, 0
        %v722 = vstv %s721
        %vm723 = vcmp.eq.s32.totalorder %v722, 1
        %vm724 = vmand %vm714, %vm723
        %vm725 = vmand %vm715, %vm723
        %vm726 = vmand %vm716, %vm723
        %vm727 = vmand %vm717, %vm723
        %vm728 = vmand %vm718, %vm723
        %vm729 = vmand %vm719, %vm723
        %vm730 = vmor %vm708, %vm724
        %vm731 = vmor %vm709, %vm725
        %vm732 = vmor %vm710, %vm726
        %vm733 = vmor %vm711, %vm727
        %vm734 = vmor %vm712, %vm728
        %vm735 = vmor %vm713, %vm729
        %vm736 = vmxor %vm730, 1
        %vm737 = vmxor %vm731, 1
        %vm738 = vmxor %vm732, 1
        %vm739 = vmxor %vm733, 1
        %vm740 = vmxor %vm734, 1
        %vm741 = vmxor %vm735, 1
        %v742 = vsel %vm736, 1, 0
        %v743 = vsel %vm737, 1, 0
        %v744 = vsel %vm738, 1, 0
        %v745 = vsel %vm739, 1, 0
        %v746 = vsel %vm740, 1, 0
        %v747 = vsel %vm741, 1, 0
        %v748 = vcvt.s32.f32 %v742
        %v749 = vcvt.s32.f32 %v743
        %v750 = vcvt.s32.f32 %v744
        %v751 = vcvt.s32.f32 %v745
        %v752 = vcvt.s32.f32 %v746
        %v753 = vcvt.s32.f32 %v747
        %v754 = vmul.f32 %v613, %v748
        %v755 = vmul.f32 %v614, %v749
        %v756 = vmul.f32 %v615, %v750
        %v757 = vmul.f32 %v616, %v751
        %v758 = vmul.f32 %v617, %v752
        %v759 = vmul.f32 %v618, %v753
        %vm760 = vcmp.ne.s32.totalorder %v692, 0
        %vm761 = vcmp.ne.s32.totalorder %v693, 0
        %vm762 = vcmp.ne.s32.totalorder %v694, 0
        %vm763 = vcmp.ne.s32.totalorder %v695, 0
        %vm764 = vcmp.ne.s32.totalorder %v696, 0
        %vm765 = vcmp.ne.s32.totalorder %v697, 0
        %v766 = vsel %vm760, 1, 0
        %v767 = vsel %vm761, 1, 0
        %v768 = vsel %vm762, 1, 0
        %v769 = vsel %vm763, 1, 0
        %v770 = vsel %vm764, 1, 0
        %v771 = vsel %vm765, 1, 0
        %v772 = vcvt.s32.f32 %v766
        %v773 = vcvt.s32.f32 %v767
        %v774 = vcvt.s32.f32 %v768
        %v775 = vcvt.s32.f32 %v769
        %v776 = vcvt.s32.f32 %v770
        %v777 = vcvt.s32.f32 %v771
        %vm778 = vcmp.ne.s32.totalorder %v692, 7
        %vm779 = vcmp.ne.s32.totalorder %v693, 7
        %vm780 = vcmp.ne.s32.totalorder %v694, 7
        %vm781 = vcmp.ne.s32.totalorder %v695, 7
        %vm782 = vcmp.ne.s32.totalorder %v696, 7
        %vm783 = vcmp.ne.s32.totalorder %v697, 7
        %v784 = vsel %vm778, 1, 0
        %v785 = vsel %vm779, 1, 0
        %v786 = vsel %vm780, 1, 0
        %v787 = vsel %vm781, 1, 0
        %v788 = vsel %vm782, 1, 0
        %v789 = vsel %vm783, 1, 0
        %v790 = vcvt.s32.f32 %v784
        %v791 = vcvt.s32.f32 %v785
        %v792 = vcvt.s32.f32 %v786
        %v793 = vcvt.s32.f32 %v787
        %v794 = vcvt.s32.f32 %v788
        %v795 = vcvt.s32.f32 %v789
        %v796 = vrot.slane %v754, 7
        %v797 = vrot.slane %v755, 7
        %v798 = vrot.slane %v756, 7
        %v799 = vrot.slane %v757, 7
        %v800 = vrot.slane %v758, 7
        %v801 = vrot.slane %v759, 7
        %vm802 = vcmp.lt.s32.totalorder %v620, 1
        %v803 = vsel %vm802, %v800, %v801
        %v804 = vsel %vm802, %v799, %v800
        %v805 = vsel %vm802, %v798, %v799
        %v806 = vsel %vm802, %v797, %v798
        %v807 = vsel %vm802, %v796, %v797
        %v808 = vsel %vm802, %v801, %v796
        %v809 = vmul.f32 %v808, %v772
        %v810 = vmul.f32 %v807, %v773
        %v811 = vmul.f32 %v806, %v774
        %v812 = vmul.f32 %v805, %v775
        %v813 = vmul.f32 %v804, %v776
        %v814 = vmul.f32 %v803, %v777
        %v815 = vpack.c.bf16 %v810, %v809
        %v816 = vpack.c.bf16 %v812, %v811
        %v817 = vpack.c.bf16 %v814, %v813
        %v818 = vpack.c.bf16 %v755, %v754
        %v819 = vpack.c.bf16 %v757, %v756
        %v820 = vpack.c.bf16 %v759, %v758
        %v821 = vrot.slane %v754, 1
        %v822 = vrot.slane %v755, 1
        %v823 = vrot.slane %v756, 1
        %v824 = vrot.slane %v757, 1
        %v825 = vrot.slane %v758, 1
        %v826 = vrot.slane %v759, 1
        %vm827 = vcmp.lt.s32.totalorder %v620, 7
        %v828 = vsel %vm827, %v825, %v826
        %v829 = vsel %vm827, %v824, %v825
        %v830 = vsel %vm827, %v823, %v824
        %v831 = vsel %vm827, %v822, %v823
        %v832 = vsel %vm827, %v821, %v822
        %v833 = vsel %vm827, %v826, %v821
        %v834 = vmul.f32 %v832, %v790
        %v835 = vmul.f32 %v831, %v791
        %v836 = vmul.f32 %v830, %v792
        %v837 = vmul.f32 %v829, %v793
        %v838 = vmul.f32 %v828, %v794
        %v839 = vmul.f32 %v833, %v795
        %v840 = vpack.c.bf16 %v835, %v834
        %v841 = vpack.c.bf16 %v837, %v836
        %v842 = vpack.c.bf16 %v839, %v838
        %vm846 = vcmask 1043456
        %v847 = vrot.slane %v815, 4
        %v848 = vrot.slane %v816, 4
        %v849 = vsel %vm846, %v847, %v848
        %v850 = vrot.slane %v817, 4
        %v851 = vsel %vm846, %v848, %v850
        %v857 = vrot.slane %v818, 4
        %v858 = vrot.slane %v819, 4
        %v859 = vsel %vm846, %v857, %v858
        %v860 = vrot.slane %v820, 4
        %v861 = vsel %vm846, %v858, %v860
        %v867 = vrot.slane %v840, 4
        %v868 = vrot.slane %v841, 4
        %v869 = vsel %vm846, %v867, %v868
        %v870 = vrot.slane %v842, 4
        %v871 = vsel %vm846, %v868, %v870
        %v874 = vld [vmem:[#allocation7] sm:$0xf]
        %v875 = vld [vmem:[#allocation7 + $0x4] sm:$0xf]
        %v876 = vld [vmem:[#allocation7 + $0x8] sm:$0xf]
        %v877 = vld [vmem:[#allocation7 + $0xc] sm:$0xf]
        %v878 = vld [vmem:[#allocation7 + $0x10] sm:$0xf]
        %v879 = vld [vmem:[#allocation7 + $0x14] sm:$0xf]
        %v880 = vld [vmem:[#allocation7 + $0x18] sm:$0xf]
        %v881 = vld [vmem:[#allocation7 + $0x1c] sm:$0xf]
        %v882 = vld [vmem:[#allocation7 + $0x20] sm:$0xf]
        %v883 = vld [vmem:[#allocation7 + $0x24] sm:$0xf]
        %v884 = vld [vmem:[#allocation7 + $0x28] sm:$0xf]
        %v885 = vld [vmem:[#allocation7 + $0x2c] sm:$0xf]
        %v886 = vld [vmem:[#allocation7 + $0x30] sm:$0xf]
        %v887 = vld [vmem:[#allocation7 + $0x34] sm:$0xf]
        %v888 = vld [vmem:[#allocation7 + $0x38] sm:$0xf]
        %v889 = vld [vmem:[#allocation7 + $0x3c] sm:$0xf]
        %v890 = vld [vmem:[#allocation7 + $0x40] sm:$0xf]
        %v891 = vld [vmem:[#allocation7 + $0x44] sm:$0xf]
        %v892 = vld [vmem:[#allocation7 + $0x48] sm:$0xf]
        %v893 = vld [vmem:[#allocation7 + $0x4c] sm:$0xf]
        %v894 = vld [vmem:[#allocation7 + $0x50] sm:$0xf]
        %v895 = vld [vmem:[#allocation7 + $0x54] sm:$0xf]
        %v896 = vld [vmem:[#allocation7 + $0x58] sm:$0xf]
        %v897 = vld [vmem:[#allocation7 + $0x5c] sm:$0xf]
        %v898 = vld [vmem:[#allocation7 + $0x60] sm:$0xf]
        %v899 = vld [vmem:[#allocation7 + $0x64] sm:$0xf]
        %v900 = vld [vmem:[#allocation7 + $0x68] sm:$0xf]
        %v901 = vld [vmem:[#allocation7 + $0x6c] sm:$0xf]
        %v902 = vld [vmem:[#allocation7 + $0x70] sm:$0xf]
        %v903 = vld [vmem:[#allocation7 + $0x74] sm:$0xf]
        %v904 = vld [vmem:[#allocation7 + $0x78] sm:$0xf]
        %v905 = vld [vmem:[#allocation7 + $0x7c] sm:$0xf]
        %v906 = vld [vmem:[#allocation7 + $0x80] sm:$0xf]
        %v907 = vld [vmem:[#allocation7 + $0x84] sm:$0xf]
        %v908 = vld [vmem:[#allocation7 + $0x88] sm:$0xf]
        %v909 = vld [vmem:[#allocation7 + $0x8c] sm:$0xf]
        %v910 = vld [vmem:[#allocation7 + $0x90] sm:$0xf]
        %v911 = vld [vmem:[#allocation7 + $0x94] sm:$0xf]
        %v912 = vld [vmem:[#allocation7 + $0x98] sm:$0xf]
        %v913 = vld [vmem:[#allocation7 + $0x9c] sm:$0xf]
        %v914 = vld [vmem:[#allocation7 + $0xa0] sm:$0xf]
        %v915 = vld [vmem:[#allocation7 + $0xa4] sm:$0xf]
        %v916 = vld [vmem:[#allocation7 + $0xa8] sm:$0xf]
        %v917 = vld [vmem:[#allocation7 + $0xac] sm:$0xf]
        %v918 = vld [vmem:[#allocation7 + $0xb0] sm:$0xf]
        %v919 = vld [vmem:[#allocation7 + $0xb4] sm:$0xf]
        %v920 = vld [vmem:[#allocation7 + $0xb8] sm:$0xf]
        %v921 = vld [vmem:[#allocation7 + $0xbc] sm:$0xf]
        %v922 = vld [vmem:[#allocation7 + $0xc0] sm:$0xf]
        %v923 = vld [vmem:[#allocation7 + $0xc4] sm:$0xf]
        %v924 = vld [vmem:[#allocation7 + $0xc8] sm:$0xf]
        %v925 = vld [vmem:[#allocation7 + $0xcc] sm:$0xf]
        %v926 = vld [vmem:[#allocation7 + $0xd0] sm:$0xf]
        %v927 = vld [vmem:[#allocation7 + $0xd4] sm:$0xf]
        %v928 = vld [vmem:[#allocation7 + $0xd8] sm:$0xf]
        %v929 = vld [vmem:[#allocation7 + $0xdc] sm:$0xf]
        %v930 = vld [vmem:[#allocation7 + $0xe0] sm:$0xf]
        %v931 = vld [vmem:[#allocation7 + $0xe4] sm:$0xf]
        %v932 = vld [vmem:[#allocation7 + $0xe8] sm:$0xf]
        %v933 = vld [vmem:[#allocation7 + $0xec] sm:$0xf]
        %v934 = vld [vmem:[#allocation7 + $0xf0] sm:$0xf]
        %v935 = vld [vmem:[#allocation7 + $0xf4] sm:$0xf]
        %v936 = vld [vmem:[#allocation7 + $0xf8] sm:$0xf]
        %v937 = vld [vmem:[#allocation7 + $0xfc] sm:$0xf]
        %v938 = vld [vmem:[#allocation7 + $0x100] sm:$0xf]
        %v939 = vld [vmem:[#allocation7 + $0x104] sm:$0xf]
        %v940 = vld [vmem:[#allocation7 + $0x108] sm:$0xf]
        %v941 = vld [vmem:[#allocation7 + $0x10c] sm:$0xf]
        %v942 = vld [vmem:[#allocation7 + $0x110] sm:$0xf]
        %v943 = vld [vmem:[#allocation7 + $0x114] sm:$0xf]
        %v944 = vld [vmem:[#allocation7 + $0x118] sm:$0xf]
        %v945 = vld [vmem:[#allocation7 + $0x11c] sm:$0xf]
        %v946 = vld [vmem:[#allocation7 + $0x120] sm:$0xf]
        %v947 = vld [vmem:[#allocation7 + $0x124] sm:$0xf]
        %v948 = vld [vmem:[#allocation7 + $0x128] sm:$0xf]
        %v949 = vld [vmem:[#allocation7 + $0x12c] sm:$0xf]
        %v950 = vld [vmem:[#allocation7 + $0x130] sm:$0xf]
        %v951 = vld [vmem:[#allocation7 + $0x134] sm:$0xf]
        %v952 = vld [vmem:[#allocation7 + $0x138] sm:$0xf]
        %v953 = vld [vmem:[#allocation7 + $0x13c] sm:$0xf]
        %v954 = vld [vmem:[#allocation7 + $0x140] sm:$0xf]
        %v955 = vld [vmem:[#allocation7 + $0x144] sm:$0xf]
        %v956 = vld [vmem:[#allocation7 + $0x148] sm:$0xf]
        %v957 = vld [vmem:[#allocation7 + $0x14c] sm:$0xf]
        %v958 = vld [vmem:[#allocation7 + $0x150] sm:$0xf]
        %v959 = vld [vmem:[#allocation7 + $0x154] sm:$0xf]
        %v960 = vld [vmem:[#allocation7 + $0x158] sm:$0xf]
        %v961 = vld [vmem:[#allocation7 + $0x15c] sm:$0xf]
        %v962 = vld [vmem:[#allocation7 + $0x160] sm:$0xf]
        %v963 = vld [vmem:[#allocation7 + $0x164] sm:$0xf]
        %v964 = vld [vmem:[#allocation7 + $0x168] sm:$0xf]
        %v965 = vld [vmem:[#allocation7 + $0x16c] sm:$0xf]
        %v966 = vld [vmem:[#allocation7 + $0x170] sm:$0xf]
        %v967 = vld [vmem:[#allocation7 + $0x174] sm:$0xf]
        %v968 = vld [vmem:[#allocation7 + $0x178] sm:$0xf]
        %v969 = vld [vmem:[#allocation7 + $0x17c] sm:$0xf]
        %v970 = vld [vmem:[#allocation7 + $0x180] sm:$0xf]
        %v971 = vld [vmem:[#allocation7 + $0x184] sm:$0xf]
        %v972 = vld [vmem:[#allocation7 + $0x188] sm:$0xf]
        %v973 = vld [vmem:[#allocation7 + $0x18c] sm:$0xf]
        %v974 = vld [vmem:[#allocation7 + $0x190] sm:$0xf]
        %v975 = vld [vmem:[#allocation7 + $0x194] sm:$0xf]
        %v976 = vld [vmem:[#allocation7 + $0x198] sm:$0xf]
        %v977 = vld [vmem:[#allocation7 + $0x19c] sm:$0xf]
        %v978 = vld [vmem:[#allocation7 + $0x1a0] sm:$0xf]
        %v979 = vld [vmem:[#allocation7 + $0x1a4] sm:$0xf]
        %v980 = vld [vmem:[#allocation7 + $0x1a8] sm:$0xf]
        %v981 = vld [vmem:[#allocation7 + $0x1ac] sm:$0xf]
        %v982 = vld [vmem:[#allocation7 + $0x1b0] sm:$0xf]
        %v983 = vld [vmem:[#allocation7 + $0x1b4] sm:$0xf]
        %v984 = vld [vmem:[#allocation7 + $0x1b8] sm:$0xf]
        %v985 = vld [vmem:[#allocation7 + $0x1bc] sm:$0xf]
        %v986 = vld [vmem:[#allocation7 + $0x1c0] sm:$0xf]
        %v987 = vld [vmem:[#allocation7 + $0x1c4] sm:$0xf]
        %v988 = vld [vmem:[#allocation7 + $0x1c8] sm:$0xf]
        %v989 = vld [vmem:[#allocation7 + $0x1cc] sm:$0xf]
        %v990 = vld [vmem:[#allocation7 + $0x1d0] sm:$0xf]
        %v991 = vld [vmem:[#allocation7 + $0x1d4] sm:$0xf]
        %v992 = vld [vmem:[#allocation7 + $0x1d8] sm:$0xf]
        %v993 = vld [vmem:[#allocation7 + $0x1dc] sm:$0xf]
        %v994 = vld [vmem:[#allocation7 + $0x1e0] sm:$0xf]
        %v995 = vld [vmem:[#allocation7 + $0x1e4] sm:$0xf]
        %v996 = vld [vmem:[#allocation7 + $0x1e8] sm:$0xf]
        %v997 = vld [vmem:[#allocation7 + $0x1ec] sm:$0xf]
        %v998 = vld [vmem:[#allocation7 + $0x1f0] sm:$0xf]
        %v999 = vld [vmem:[#allocation7 + $0x1f4] sm:$0xf]
        %v1000 = vld [vmem:[#allocation7 + $0x1f8] sm:$0xf]
        %v1001 = vld [vmem:[#allocation7 + $0x1fc] sm:$0xf]
        %v1002 = vld [vmem:[#allocation7 + $0x200] sm:$0xf]
        %v1003 = vld [vmem:[#allocation7 + $0x204] sm:$0xf]
        %v1004 = vld [vmem:[#allocation7 + $0x208] sm:$0xf]
        %v1005 = vld [vmem:[#allocation7 + $0x20c] sm:$0xf]
        %v1006 = vld [vmem:[#allocation7 + $0x210] sm:$0xf]
        %v1007 = vld [vmem:[#allocation7 + $0x214] sm:$0xf]
        %v1008 = vld [vmem:[#allocation7 + $0x218] sm:$0xf]
        %v1009 = vld [vmem:[#allocation7 + $0x21c] sm:$0xf]
        %v1010 = vld [vmem:[#allocation7 + $0x220] sm:$0xf]
        %v1011 = vld [vmem:[#allocation7 + $0x224] sm:$0xf]
        %v1012 = vld [vmem:[#allocation7 + $0x228] sm:$0xf]
        %v1013 = vld [vmem:[#allocation7 + $0x22c] sm:$0xf]
        %v1014 = vld [vmem:[#allocation7 + $0x230] sm:$0xf]
        %v1015 = vld [vmem:[#allocation7 + $0x234] sm:$0xf]
        %v1016 = vld [vmem:[#allocation7 + $0x238] sm:$0xf]
        %v1017 = vld [vmem:[#allocation7 + $0x23c] sm:$0xf]
        %v1162 = vunpack.c.l.b16 %v874
        %v1163 = vunpack.c.l.b16 %v875
        %v1164 = vunpack.c.l.b16 %v876
        %v1165 = vunpack.c.l.b16 %v877
        %v1166 = vunpack.c.l.b16 %v878
        %v1167 = vunpack.c.l.b16 %v879
        %v1168 = vunpack.c.l.b16 %v880
        %v1169 = vunpack.c.l.b16 %v881
        %v1170 = vunpack.c.l.b16 %v882
        %v1171 = vunpack.c.l.b16 %v883
        %v1172 = vunpack.c.l.b16 %v884
        %v1173 = vunpack.c.l.b16 %v885
        %v1174 = vunpack.c.l.b16 %v886
        %v1175 = vunpack.c.l.b16 %v887
        %v1176 = vunpack.c.l.b16 %v888
        %v1177 = vunpack.c.l.b16 %v889
        %v1178 = vunpack.c.l.b16 %v890
        %v1179 = vunpack.c.l.b16 %v891
        %v1180 = vunpack.c.l.b16 %v892
        %v1181 = vunpack.c.l.b16 %v893
        %v1182 = vunpack.c.l.b16 %v894
        %v1183 = vunpack.c.l.b16 %v895
        %v1184 = vunpack.c.l.b16 %v896
        %v1185 = vunpack.c.l.b16 %v897
        %v1186 = vunpack.c.l.b16 %v898
        %v1187 = vunpack.c.l.b16 %v899
        %v1188 = vunpack.c.l.b16 %v900
        %v1189 = vunpack.c.l.b16 %v901
        %v1190 = vunpack.c.l.b16 %v902
        %v1191 = vunpack.c.l.b16 %v903
        %v1192 = vunpack.c.l.b16 %v904
        %v1193 = vunpack.c.l.b16 %v905
        %v1194 = vunpack.c.l.b16 %v906
        %v1195 = vunpack.c.l.b16 %v907
        %v1196 = vunpack.c.l.b16 %v908
        %v1197 = vunpack.c.l.b16 %v909
        %v1198 = vunpack.c.l.b16 %v910
        %v1199 = vunpack.c.l.b16 %v911
        %v1200 = vunpack.c.l.b16 %v912
        %v1201 = vunpack.c.l.b16 %v913
        %v1202 = vunpack.c.l.b16 %v914
        %v1203 = vunpack.c.l.b16 %v915
        %v1204 = vunpack.c.l.b16 %v916
        %v1205 = vunpack.c.l.b16 %v917
        %v1206 = vunpack.c.l.b16 %v918
        %v1207 = vunpack.c.l.b16 %v919
        %v1208 = vunpack.c.l.b16 %v920
        %v1209 = vunpack.c.l.b16 %v921
        %v1210 = vunpack.c.l.b16 %v922
        %v1211 = vunpack.c.l.b16 %v923
        %v1212 = vunpack.c.l.b16 %v924
        %v1213 = vunpack.c.l.b16 %v925
        %v1214 = vunpack.c.l.b16 %v926
        %v1215 = vunpack.c.l.b16 %v927
        %v1216 = vunpack.c.l.b16 %v928
        %v1217 = vunpack.c.l.b16 %v929
        %v1218 = vunpack.c.l.b16 %v930
        %v1219 = vunpack.c.l.b16 %v931
        %v1220 = vunpack.c.l.b16 %v932
        %v1221 = vunpack.c.l.b16 %v933
        %v1222 = vunpack.c.l.b16 %v934
        %v1223 = vunpack.c.l.b16 %v935
        %v1224 = vunpack.c.l.b16 %v936
        %v1225 = vunpack.c.l.b16 %v937
        %v1226 = vunpack.c.l.b16 %v938
        %v1227 = vunpack.c.l.b16 %v939
        %v1228 = vunpack.c.l.b16 %v940
        %v1229 = vunpack.c.l.b16 %v941
        %v1230 = vunpack.c.l.b16 %v942
        %v1231 = vunpack.c.l.b16 %v943
        %v1232 = vunpack.c.l.b16 %v944
        %v1233 = vunpack.c.l.b16 %v945
        %v1234 = vunpack.c.l.b16 %v946
        %v1235 = vunpack.c.l.b16 %v947
        %v1236 = vunpack.c.l.b16 %v948
        %v1237 = vunpack.c.l.b16 %v949
        %v1238 = vunpack.c.l.b16 %v950
        %v1239 = vunpack.c.l.b16 %v951
        %v1240 = vunpack.c.l.b16 %v952
        %v1241 = vunpack.c.l.b16 %v953
        %v1242 = vunpack.c.l.b16 %v954
        %v1243 = vunpack.c.l.b16 %v955
        %v1244 = vunpack.c.l.b16 %v956
        %v1245 = vunpack.c.l.b16 %v957
        %v1246 = vunpack.c.l.b16 %v958
        %v1247 = vunpack.c.l.b16 %v959
        %v1248 = vunpack.c.l.b16 %v960
        %v1249 = vunpack.c.l.b16 %v961
        %v1250 = vunpack.c.l.b16 %v962
        %v1251 = vunpack.c.l.b16 %v963
        %v1252 = vunpack.c.l.b16 %v964
        %v1253 = vunpack.c.l.b16 %v965
        %v1254 = vunpack.c.l.b16 %v966
        %v1255 = vunpack.c.l.b16 %v967
        %v1256 = vunpack.c.l.b16 %v968
        %v1257 = vunpack.c.l.b16 %v969
        %v1258 = vunpack.c.l.b16 %v970
        %v1259 = vunpack.c.l.b16 %v971
        %v1260 = vunpack.c.l.b16 %v972
        %v1261 = vunpack.c.l.b16 %v973
        %v1262 = vunpack.c.l.b16 %v974
        %v1263 = vunpack.c.l.b16 %v975
        %v1264 = vunpack.c.l.b16 %v976
        %v1265 = vunpack.c.l.b16 %v977
        %v1266 = vunpack.c.l.b16 %v978
        %v1267 = vunpack.c.l.b16 %v979
        %v1268 = vunpack.c.l.b16 %v980
        %v1269 = vunpack.c.l.b16 %v981
        %v1270 = vunpack.c.l.b16 %v982
        %v1271 = vunpack.c.l.b16 %v983
        %v1272 = vunpack.c.l.b16 %v984
        %v1273 = vunpack.c.l.b16 %v985
        %v1274 = vunpack.c.l.b16 %v986
        %v1275 = vunpack.c.l.b16 %v987
        %v1276 = vunpack.c.l.b16 %v988
        %v1277 = vunpack.c.l.b16 %v989
        %v1278 = vunpack.c.l.b16 %v990
        %v1279 = vunpack.c.l.b16 %v991
        %v1280 = vunpack.c.l.b16 %v992
        %v1281 = vunpack.c.l.b16 %v993
        %v1282 = vunpack.c.l.b16 %v994
        %v1283 = vunpack.c.l.b16 %v995
        %v1284 = vunpack.c.l.b16 %v996
        %v1285 = vunpack.c.l.b16 %v997
        %v1286 = vunpack.c.l.b16 %v998
        %v1287 = vunpack.c.l.b16 %v999
        %v1288 = vunpack.c.l.b16 %v1000
        %v1289 = vunpack.c.l.b16 %v1001
        %v1290 = vunpack.c.l.b16 %v1002
        %v1291 = vunpack.c.l.b16 %v1003
        %v1292 = vunpack.c.l.b16 %v1004
        %v1293 = vunpack.c.l.b16 %v1005
        %v1294 = vunpack.c.l.b16 %v1006
        %v1295 = vunpack.c.l.b16 %v1007
        %v1296 = vunpack.c.l.b16 %v1008
        %v1297 = vunpack.c.l.b16 %v1009
        %v1298 = vunpack.c.l.b16 %v1010
        %v1299 = vunpack.c.l.b16 %v1011
        %v1300 = vunpack.c.l.b16 %v1012
        %v1301 = vunpack.c.l.b16 %v1013
        %v1302 = vunpack.c.l.b16 %v1014
        %v1303 = vunpack.c.l.b16 %v1015
        %v1304 = vunpack.c.l.b16 %v1016
        %v1305 = vunpack.c.l.b16 %v1017
        %v1306 = vpack.c.b16 %v1163, %v1162
        %v1307 = vpack.c.b16 %v1165, %v1164
        %v1308 = vpack.c.b16 %v1167, %v1166
        %v1309 = vpack.c.b16 %v1169, %v1168
        %v1310 = vpack.c.b16 %v1171, %v1170
        %v1311 = vpack.c.b16 %v1173, %v1172
        %v1312 = vpack.c.b16 %v1175, %v1174
        %v1313 = vpack.c.b16 %v1177, %v1176
        %v1314 = vpack.c.b16 %v1179, %v1178
        %v1315 = vpack.c.b16 %v1181, %v1180
        %v1316 = vpack.c.b16 %v1183, %v1182
        %v1317 = vpack.c.b16 %v1185, %v1184
        %v1318 = vpack.c.b16 %v1187, %v1186
        %v1319 = vpack.c.b16 %v1189, %v1188
        %v1320 = vpack.c.b16 %v1191, %v1190
        %v1321 = vpack.c.b16 %v1193, %v1192
        %v1322 = vpack.c.b16 %v1195, %v1194
        %v1323 = vpack.c.b16 %v1197, %v1196
        %v1324 = vpack.c.b16 %v1199, %v1198
        %v1325 = vpack.c.b16 %v1201, %v1200
        %v1326 = vpack.c.b16 %v1203, %v1202
        %v1327 = vpack.c.b16 %v1205, %v1204
        %v1328 = vpack.c.b16 %v1207, %v1206
        %v1329 = vpack.c.b16 %v1209, %v1208
        %v1330 = vpack.c.b16 %v1211, %v1210
        %v1331 = vpack.c.b16 %v1213, %v1212
        %v1332 = vpack.c.b16 %v1215, %v1214
        %v1333 = vpack.c.b16 %v1217, %v1216
        %v1334 = vpack.c.b16 %v1219, %v1218
        %v1335 = vpack.c.b16 %v1221, %v1220
        %v1336 = vpack.c.b16 %v1223, %v1222
        %v1337 = vpack.c.b16 %v1225, %v1224
        %v1338 = vpack.c.b16 %v1227, %v1226
        %v1339 = vpack.c.b16 %v1229, %v1228
        %v1340 = vpack.c.b16 %v1231, %v1230
        %v1341 = vpack.c.b16 %v1233, %v1232
        %v1342 = vpack.c.b16 %v1235, %v1234
        %v1343 = vpack.c.b16 %v1237, %v1236
        %v1344 = vpack.c.b16 %v1239, %v1238
        %v1345 = vpack.c.b16 %v1241, %v1240
        %v1346 = vpack.c.b16 %v1243, %v1242
        %v1347 = vpack.c.b16 %v1245, %v1244
        %v1348 = vpack.c.b16 %v1247, %v1246
        %v1349 = vpack.c.b16 %v1249, %v1248
        %v1350 = vpack.c.b16 %v1251, %v1250
        %v1351 = vpack.c.b16 %v1253, %v1252
        %v1352 = vpack.c.b16 %v1255, %v1254
        %v1353 = vpack.c.b16 %v1257, %v1256
        %v1354 = vpack.c.b16 %v1259, %v1258
        %v1355 = vpack.c.b16 %v1261, %v1260
        %v1356 = vpack.c.b16 %v1263, %v1262
        %v1357 = vpack.c.b16 %v1265, %v1264
        %v1358 = vpack.c.b16 %v1267, %v1266
        %v1359 = vpack.c.b16 %v1269, %v1268
        %v1360 = vpack.c.b16 %v1271, %v1270
        %v1361 = vpack.c.b16 %v1273, %v1272
        %v1362 = vpack.c.b16 %v1275, %v1274
        %v1363 = vpack.c.b16 %v1277, %v1276
        %v1364 = vpack.c.b16 %v1279, %v1278
        %v1365 = vpack.c.b16 %v1281, %v1280
        %v1366 = vpack.c.b16 %v1283, %v1282
        %v1367 = vpack.c.b16 %v1285, %v1284
        %v1368 = vpack.c.b16 %v1287, %v1286
        %v1369 = vpack.c.b16 %v1289, %v1288
        %v1370 = vpack.c.b16 %v1291, %v1290
        %v1371 = vpack.c.b16 %v1293, %v1292
        %v1372 = vpack.c.b16 %v1295, %v1294
        %v1373 = vpack.c.b16 %v1297, %v1296
        %v1374 = vpack.c.b16 %v1299, %v1298
        %v1375 = vpack.c.b16 %v1301, %v1300
        %v1376 = vpack.c.b16 %v1303, %v1302
        %v1377 = vpack.c.b16 %v1305, %v1304
        %1450 = vmatprep.subr.bf16.mxu0 0
        %1451 = vmatpush1.bf16.msra.mxu0 %v1313
        %1452 = vmatprep.subr.bf16.mxu0 0
        %1453 = vmatpush1.bf16.msra.mxu0 %v1312
        %1454 = vmatprep.subr.bf16.mxu0 0
        %1455 = vmatpush1.bf16.msra.mxu0 %v1311
        %1456 = vmatprep.subr.bf16.mxu0 0
        %1457 = vmatpush1.bf16.msra.mxu0 %v1310
        %1458 = vmatprep.subr.bf16.mxu0 0
        %1459 = vmatpush1.bf16.msra.mxu0 %v1309
        %1460 = vmatprep.subr.bf16.mxu0 0
        %1461 = vmatpush1.bf16.msra.mxu0 %v1308
        %1462 = vmatprep.subr.bf16.mxu0 0
        %1463 = vmatpush1.bf16.msra.mxu0 %v1307
        %1464 = vmatprep.subr.bf16.mxu0 0
        %1465 = vmatpush1.bf16.msra.mxu0 %v1306
        %1466 = vmatprep.subr.bf16.mxu0 0
        %1467 = vmatpush2.bf16.msra.mxu0 %v1321
        %1468 = vmatprep.subr.bf16.mxu0 0
        %1469 = vmatpush2.bf16.msra.mxu0 %v1320
        %1470 = vmatprep.subr.bf16.mxu0 0
        %1471 = vmatpush2.bf16.msra.mxu0 %v1319
        %1472 = vmatprep.subr.bf16.mxu0 0
        %1473 = vmatpush2.bf16.msra.mxu0 %v1318
        %1474 = vmatprep.subr.bf16.mxu0 0
        %1475 = vmatpush2.bf16.msra.mxu0 %v1317
        %1476 = vmatprep.subr.bf16.mxu0 0
        %1477 = vmatpush2.bf16.msra.mxu0 %v1316
        %1478 = vmatprep.subr.bf16.mxu0 0
        %1479 = vmatpush2.bf16.msra.mxu0 %v1315
        %1480 = vmatprep.subr.bf16.mxu0 0
        %1481 = vmatpush2.bf16.msra.mxu0 %v1314
        %1482 = vmatprep.mubr.bf16.mxu0 %v818
        %1483 = vmatmul.mubr.bf16.gmra.mxu0 %v815
        %v1484 = vpop.f32.mrf.mxu0
        %v1485 = vadd.f32 0.0, %v1484
        %v1486 = vpop.f32.mrf.mxu0
        %v1487 = vpop.f32.mrf.mxu0
        %v1488 = vadd.f32 0.0, %v1487
        %v1489 = vpop.f32.mrf.mxu0
        %1490 = vmatprep.mubr.bf16.mxu0 %v819
        %1491 = vmatmul.mubr.bf16.gmra.mxu0 %v816
        %v1492 = vpop.f32.mrf.mxu0
        %v1493 = vadd.f32 0.0, %v1492
        %v1494 = vpop.f32.mrf.mxu0
        %v1495 = vpop.f32.mrf.mxu0
        %v1496 = vadd.f32 0.0, %v1495
        %v1497 = vpop.f32.mrf.mxu0
        %1498 = vdwg.mxu0
        %1499 = vmatprep.subr.bf16.mxu0 0
        %1500 = vmatpush1.bf16.msra.mxu0 %v1329
        %1501 = vmatprep.subr.bf16.mxu0 0
        %1502 = vmatpush1.bf16.msra.mxu0 %v1328
        %1503 = vmatprep.subr.bf16.mxu0 0
        %1504 = vmatpush1.bf16.msra.mxu0 %v1327
        %1505 = vmatprep.subr.bf16.mxu0 0
        %1506 = vmatpush1.bf16.msra.mxu0 %v1326
        %1507 = vmatprep.subr.bf16.mxu0 0
        %1508 = vmatpush1.bf16.msra.mxu0 %v1325
        %1509 = vmatprep.subr.bf16.mxu0 0
        %1510 = vmatpush1.bf16.msra.mxu0 %v1324
        %1511 = vmatprep.subr.bf16.mxu0 0
        %1512 = vmatpush1.bf16.msra.mxu0 %v1323
        %1513 = vmatprep.subr.bf16.mxu0 0
        %1514 = vmatpush1.bf16.msra.mxu0 %v1322
        %1515 = vmatprep.subr.bf16.mxu0 0
        %1516 = vmatpush2.bf16.msra.mxu0 %v1337
        %1517 = vmatprep.subr.bf16.mxu0 0
        %1518 = vmatpush2.bf16.msra.mxu0 %v1336
        %1519 = vmatprep.subr.bf16.mxu0 0
        %1520 = vmatpush2.bf16.msra.mxu0 %v1335
        %1521 = vmatprep.subr.bf16.mxu0 0
        %1522 = vmatpush2.bf16.msra.mxu0 %v1334
        %1523 = vmatprep.subr.bf16.mxu0 0
        %1524 = vmatpush2.bf16.msra.mxu0 %v1333
        %1525 = vmatprep.subr.bf16.mxu0 0
        %1526 = vmatpush2.bf16.msra.mxu0 %v1332
        %1527 = vmatprep.subr.bf16.mxu0 0
        %1528 = vmatpush2.bf16.msra.mxu0 %v1331
        %1529 = vmatprep.subr.bf16.mxu0 0
        %1530 = vmatpush2.bf16.msra.mxu0 %v1330
        %1531 = vmatprep.mubr.bf16.mxu0 %v849
        %1532 = vmatmul.mubr.bf16.gmra.mxu0 %v840
        %v1533 = vpop.f32.mrf.mxu0
        %v1534 = vadd.f32 %v1485, %v1533
        %v1535 = vpop.f32.mrf.mxu0
        %v1536 = vpop.f32.mrf.mxu0
        %v1537 = vadd.f32 %v1488, %v1536
        %v1538 = vpop.f32.mrf.mxu0
        %1539 = vmatprep.mubr.bf16.mxu0 %v851
        %1540 = vmatmul.mubr.bf16.gmra.mxu0 %v841
        %v1541 = vpop.f32.mrf.mxu0
        %v1542 = vadd.f32 %v1493, %v1541
        %v1543 = vpop.f32.mrf.mxu0
        %v1544 = vpop.f32.mrf.mxu0
        %v1545 = vadd.f32 %v1496, %v1544
        %v1546 = vpop.f32.mrf.mxu0
        %1547 = vdwg.mxu0
        %1548 = vmatprep.subr.bf16.mxu0 0
        %1549 = vmatpush1.bf16.msra.mxu0 %v1345
        %1550 = vmatprep.subr.bf16.mxu0 0
        %1551 = vmatpush1.bf16.msra.mxu0 %v1344
        %1552 = vmatprep.subr.bf16.mxu0 0
        %1553 = vmatpush1.bf16.msra.mxu0 %v1343
        %1554 = vmatprep.subr.bf16.mxu0 0
        %1555 = vmatpush1.bf16.msra.mxu0 %v1342
        %1556 = vmatprep.subr.bf16.mxu0 0
        %1557 = vmatpush1.bf16.msra.mxu0 %v1341
        %1558 = vmatprep.subr.bf16.mxu0 0
        %1559 = vmatpush1.bf16.msra.mxu0 %v1340
        %1560 = vmatprep.subr.bf16.mxu0 0
        %1561 = vmatpush1.bf16.msra.mxu0 %v1339
        %1562 = vmatprep.subr.bf16.mxu0 0
        %1563 = vmatpush1.bf16.msra.mxu0 %v1338
        %1564 = vmatprep.subr.bf16.mxu0 0
        %1565 = vmatpush2.bf16.msra.mxu0 %v1353
        %1566 = vmatprep.subr.bf16.mxu0 0
        %1567 = vmatpush2.bf16.msra.mxu0 %v1352
        %1568 = vmatprep.subr.bf16.mxu0 0
        %1569 = vmatpush2.bf16.msra.mxu0 %v1351
        %1570 = vmatprep.subr.bf16.mxu0 0
        %1571 = vmatpush2.bf16.msra.mxu0 %v1350
        %1572 = vmatprep.subr.bf16.mxu0 0
        %1573 = vmatpush2.bf16.msra.mxu0 %v1349
        %1574 = vmatprep.subr.bf16.mxu0 0
        %1575 = vmatpush2.bf16.msra.mxu0 %v1348
        %1576 = vmatprep.subr.bf16.mxu0 0
        %1577 = vmatpush2.bf16.msra.mxu0 %v1347
        %1578 = vmatprep.subr.bf16.mxu0 0
        %1579 = vmatpush2.bf16.msra.mxu0 %v1346
        %1580 = vmatprep.mubr.bf16.mxu0 %v869
        %1581 = vmatmul.mubr.bf16.gmra.mxu0 %v859
        %v1582 = vpop.f32.mrf.mxu0
        %v1583 = vadd.f32 %v1534, %v1582
        %v1584 = vpop.f32.mrf.mxu0
        %v1585 = vpop.f32.mrf.mxu0
        %v1586 = vadd.f32 %v1537, %v1585
        %v1587 = vpop.f32.mrf.mxu0
        %1588 = vmatprep.mubr.bf16.mxu0 %v871
        %1589 = vmatmul.mubr.bf16.gmra.mxu0 %v861
        %v1590 = vpop.f32.mrf.mxu0
        %v1591 = vadd.f32 %v1542, %v1590
        %v1592 = vpop.f32.mrf.mxu0
        %v1593 = vpop.f32.mrf.mxu0
        %v1594 = vadd.f32 %v1545, %v1593
        %v1595 = vpop.f32.mrf.mxu0
        %1596 = vdwg.mxu0
        %1597 = vmatprep.subr.bf16.mxu0 0
        %1598 = vmatpush1.bf16.msra.mxu0 %v1361
        %1599 = vmatprep.subr.bf16.mxu0 0
        %1600 = vmatpush1.bf16.msra.mxu0 %v1360
        %1601 = vmatprep.subr.bf16.mxu0 0
        %1602 = vmatpush1.bf16.msra.mxu0 %v1359
        %1603 = vmatprep.subr.bf16.mxu0 0
        %1604 = vmatpush1.bf16.msra.mxu0 %v1358
        %1605 = vmatprep.subr.bf16.mxu0 0
        %1606 = vmatpush1.bf16.msra.mxu0 %v1357
        %1607 = vmatprep.subr.bf16.mxu0 0
        %1608 = vmatpush1.bf16.msra.mxu0 %v1356
        %1609 = vmatprep.subr.bf16.mxu0 0
        %1610 = vmatpush1.bf16.msra.mxu0 %v1355
        %1611 = vmatprep.subr.bf16.mxu0 0
        %1612 = vmatpush1.bf16.msra.mxu0 %v1354
        %1613 = vmatprep.subr.bf16.mxu0 0
        %1614 = vmatpush2.bf16.msra.mxu0 %v1369
        %1615 = vmatprep.subr.bf16.mxu0 0
        %1616 = vmatpush2.bf16.msra.mxu0 %v1368
        %1617 = vmatprep.subr.bf16.mxu0 0
        %1618 = vmatpush2.bf16.msra.mxu0 %v1367
        %1619 = vmatprep.subr.bf16.mxu0 0
        %1620 = vmatpush2.bf16.msra.mxu0 %v1366
        %1621 = vmatprep.subr.bf16.mxu0 0
        %1622 = vmatpush2.bf16.msra.mxu0 %v1365
        %1623 = vmatprep.subr.bf16.mxu0 0
        %1624 = vmatpush2.bf16.msra.mxu0 %v1364
        %1625 = vmatprep.subr.bf16.mxu0 0
        %1626 = vmatpush2.bf16.msra.mxu0 %v1363
        %1627 = vmatprep.subr.bf16.mxu0 0
        %1628 = vmatpush2.bf16.msra.mxu0 %v1362
        %1629 = vmatprep.mubr.bf16.mxu0 %v819
        %1630 = vmatmul.mubr.bf16.gmra.mxu0 %v816
        %v1631 = vpop.f32.mrf.mxu0
        %v1632 = vadd.f32 %v1583, %v1631
        %v1633 = vpop.f32.mrf.mxu0
        %v1634 = vpop.f32.mrf.mxu0
        %v1635 = vadd.f32 %v1586, %v1634
        %v1636 = vpop.f32.mrf.mxu0
        %1637 = vmatprep.mubr.bf16.mxu0 %v820
        %1638 = vmatmul.mubr.bf16.gmra.mxu0 %v817
        %v1639 = vpop.f32.mrf.mxu0
        %v1640 = vadd.f32 %v1591, %v1639
        %v1641 = vpop.f32.mrf.mxu0
        %v1642 = vpop.f32.mrf.mxu0
        %v1643 = vadd.f32 %v1594, %v1642
        %v1644 = vpop.f32.mrf.mxu0
        %1645 = vdwg.mxu0
        %1646 = vmatprep.subr.bf16.mxu0 0
        %1647 = vmatpush1.bf16.msra.mxu0 %v1377
        %1648 = vmatprep.subr.bf16.mxu0 0
        %1649 = vmatpush1.bf16.msra.mxu0 %v1376
        %1650 = vmatprep.subr.bf16.mxu0 0
        %1651 = vmatpush1.bf16.msra.mxu0 %v1375
        %1652 = vmatprep.subr.bf16.mxu0 0
        %1653 = vmatpush1.bf16.msra.mxu0 %v1374
        %1654 = vmatprep.subr.bf16.mxu0 0
        %1655 = vmatpush1.bf16.msra.mxu0 %v1373
        %1656 = vmatprep.subr.bf16.mxu0 0
        %1657 = vmatpush1.bf16.msra.mxu0 %v1372
        %1658 = vmatprep.subr.bf16.mxu0 0
        %1659 = vmatpush1.bf16.msra.mxu0 %v1371
        %1660 = vmatprep.subr.bf16.mxu0 0
        %1661 = vmatpush1.bf16.msra.mxu0 %v1370
        %1662 = vmatprep.subr.bf16.mxu0 0
        %1663 = vmatpush2.bf16.msra.mxu0 0
        %1664 = vmatprep.subr.bf16.mxu0 0
        %1665 = vmatpush2.bf16.msra.mxu0 0
        %1666 = vmatprep.subr.bf16.mxu0 0
        %1667 = vmatpush2.bf16.msra.mxu0 0
        %1668 = vmatprep.subr.bf16.mxu0 0
        %1669 = vmatpush2.bf16.msra.mxu0 0
        %1670 = vmatprep.subr.bf16.mxu0 0
        %1671 = vmatpush2.bf16.msra.mxu0 0
        %1672 = vmatprep.subr.bf16.mxu0 0
        %1673 = vmatpush2.bf16.msra.mxu0 0
        %1674 = vmatprep.subr.bf16.mxu0 0
        %1675 = vmatpush2.bf16.msra.mxu0 0
        %1676 = vmatprep.subr.bf16.mxu0 0
        %1677 = vmatpush2.bf16.msra.mxu0 0
        %1678 = vmatprep.mubr.bf16.mxu0 0
        %1679 = vmatmul.mubr.bf16.gmra.mxu0 %v841
        %v1680 = vpop.f32.mrf.mxu0
        %v1681 = vadd.f32 %v1632, %v1680
        %v1682 = vpop.f32.mrf.mxu0
        %v1683 = vpop.f32.mrf.mxu0
        %v1684 = vadd.f32 %v1635, %v1683
        %v1685 = vpop.f32.mrf.mxu0
        %1686 = vmatprep.mubr.bf16.mxu0 0
        %1687 = vmatmul.mubr.bf16.gmra.mxu0 %v842
        %v1688 = vpop.f32.mrf.mxu0
        %v1689 = vadd.f32 %v1640, %v1688
        %v1690 = vpop.f32.mrf.mxu0
        %v1691 = vpop.f32.mrf.mxu0
        %v1692 = vadd.f32 %v1643, %v1691
        %v1693 = vpop.f32.mrf.mxu0
        %1694 = vdwg.mxu0
        %v1695 = vld [vmem:[%s6] sm:$0x1]
        %v1697 = vlaneseq
        %v1698 = vshrl.u32 %v1697, 7
        %v1699 = vsub.s32 0, %v1698
        %v1700 = vrot.slane %v1695, %v1699
        %v1702 = vmul.f32 %v1681, %v1700
        %v1703 = vmul.f32 %v1684, %v1700
        %v1704 = vmul.f32 %v1689, %v1700
        %v1705 = vmul.f32 %v1692, %v1700
        %v1706 = vld [vmem:[%s7] sm:$0x1]
        %v1708 = vlaneseq
        %v1709 = vshrl.u32 %v1708, 7
        %v1710 = vsub.s32 0, %v1709
        %v1711 = vrot.slane %v1706, %v1710
        %v1713 = vadd.f32 %v1702, %v1711
        %v1714 = vadd.f32 %v1703, %v1711
        %v1715 = vadd.f32 %v1704, %v1711
        %v1716 = vadd.f32 %v1705, %v1711
        %v1717 = vmax.f32 %v1713, 0.0
        %v1718 = vmax.f32 %v1714, 0.0
        %v1719 = vmax.f32 %v1715, 0.0
        %v1720 = vmax.f32 %v1716, 0.0
        %v1721 = vpack.c.bf16 %v1718, %v1717
        %v1722 = vpack.c.bf16 %v1720, %v1719
        %v1723 = vld [vmem:[#allocation8] sm:$0xf]
        %v1724 = vld [vmem:[#allocation8 + $0x4] sm:$0xf]
        %v1725 = vld [vmem:[#allocation8 + $0x8] sm:$0xf]
        %v1726 = vld [vmem:[#allocation8 + $0xc] sm:$0xf]
        %v1727 = vld [vmem:[#allocation8 + $0x10] sm:$0xf]
        %v1728 = vld [vmem:[#allocation8 + $0x14] sm:$0xf]
        %v1729 = vld [vmem:[#allocation8 + $0x18] sm:$0xf]
        %v1730 = vld [vmem:[#allocation8 + $0x1c] sm:$0xf]
        %v1731 = vld [vmem:[#allocation8 + $0x20] sm:$0xf]
        %v1732 = vld [vmem:[#allocation8 + $0x24] sm:$0xf]
        %v1733 = vld [vmem:[#allocation8 + $0x28] sm:$0xf]
        %v1734 = vld [vmem:[#allocation8 + $0x2c] sm:$0xf]
        %v1735 = vld [vmem:[#allocation8 + $0x30] sm:$0xf]
        %v1736 = vld [vmem:[#allocation8 + $0x34] sm:$0xf]
        %v1737 = vld [vmem:[#allocation8 + $0x38] sm:$0xf]
        %v1738 = vld [vmem:[#allocation8 + $0x3c] sm:$0xf]
        %v1755 = vunpack.c.l.b16 %v1723
        %v1756 = vunpack.c.l.b16 %v1724
        %v1757 = vunpack.c.l.b16 %v1725
        %v1758 = vunpack.c.l.b16 %v1726
        %v1759 = vunpack.c.l.b16 %v1727
        %v1760 = vunpack.c.l.b16 %v1728
        %v1761 = vunpack.c.l.b16 %v1729
        %v1762 = vunpack.c.l.b16 %v1730
        %v1763 = vunpack.c.l.b16 %v1731
        %v1764 = vunpack.c.l.b16 %v1732
        %v1765 = vunpack.c.l.b16 %v1733
        %v1766 = vunpack.c.l.b16 %v1734
        %v1767 = vunpack.c.l.b16 %v1735
        %v1768 = vunpack.c.l.b16 %v1736
        %v1769 = vunpack.c.l.b16 %v1737
        %v1770 = vunpack.c.l.b16 %v1738
        %v1771 = vpack.c.b16 %v1756, %v1755
        %v1772 = vpack.c.b16 %v1758, %v1757
        %v1773 = vpack.c.b16 %v1760, %v1759
        %v1774 = vpack.c.b16 %v1762, %v1761
        %v1775 = vpack.c.b16 %v1764, %v1763
        %v1776 = vpack.c.b16 %v1766, %v1765
        %v1777 = vpack.c.b16 %v1768, %v1767
        %v1778 = vpack.c.b16 %v1770, %v1769
        %1787 = vmatprep.subr.bf16.mxu0 0
        %1788 = vmatpush1.bf16.msra.mxu0 %v1778
        %1789 = vmatprep.subr.bf16.mxu0 0
        %1790 = vmatpush1.bf16.msra.mxu0 %v1777
        %1791 = vmatprep.subr.bf16.mxu0 0
        %1792 = vmatpush1.bf16.msra.mxu0 %v1776
        %1793 = vmatprep.subr.bf16.mxu0 0
        %1794 = vmatpush1.bf16.msra.mxu0 %v1775
        %1795 = vmatprep.subr.bf16.mxu0 0
        %1796 = vmatpush1.bf16.msra.mxu0 %v1774
        %1797 = vmatprep.subr.bf16.mxu0 0
        %1798 = vmatpush1.bf16.msra.mxu0 %v1773
        %1799 = vmatprep.subr.bf16.mxu0 0
        %1800 = vmatpush1.bf16.msra.mxu0 %v1772
        %1801 = vmatprep.subr.bf16.mxu0 0
        %1802 = vmatpush1.bf16.msra.mxu0 %v1771
        %1803 = vmatprep.subr.bf16.mxu0 0
        %1804 = vmatpush2.bf16.msra.mxu0 0
        %1805 = vmatprep.subr.bf16.mxu0 0
        %1806 = vmatpush2.bf16.msra.mxu0 0
        %1807 = vmatprep.subr.bf16.mxu0 0
        %1808 = vmatpush2.bf16.msra.mxu0 0
        %1809 = vmatprep.subr.bf16.mxu0 0
        %1810 = vmatpush2.bf16.msra.mxu0 0
        %1811 = vmatprep.subr.bf16.mxu0 0
        %1812 = vmatpush2.bf16.msra.mxu0 0
        %1813 = vmatprep.subr.bf16.mxu0 0
        %1814 = vmatpush2.bf16.msra.mxu0 0
        %1815 = vmatprep.subr.bf16.mxu0 0
        %1816 = vmatpush2.bf16.msra.mxu0 0
        %1817 = vmatprep.subr.bf16.mxu0 0
        %1818 = vmatpush2.bf16.msra.mxu0 0
        %1819 = vmatprep.mubr.bf16.mxu0 0
        %1820 = vmatmul.mubr.bf16.gmra.mxu0 %v1721
        %v1821 = vpop.f32.mrf.mxu0
        %v1822 = vadd.f32 0.0, %v1821
        %v1823 = vpop.f32.mrf.mxu0
        %v1824 = vpop.f32.mrf.mxu0
        %v1825 = vadd.f32 0.0, %v1824
        %v1826 = vpop.f32.mrf.mxu0
        %1827 = vmatprep.mubr.bf16.mxu0 0
        %1828 = vmatmul.mubr.bf16.gmra.mxu0 %v1722
        %v1829 = vpop.f32.mrf.mxu0
        %v1830 = vadd.f32 0.0, %v1829
        %v1831 = vpop.f32.mrf.mxu0
        %v1832 = vpop.f32.mrf.mxu0
        %v1833 = vadd.f32 0.0, %v1832
        %v1834 = vpop.f32.mrf.mxu0
        %1835 = vdwg.mxu0
        %v1836 = vld [vmem:[%s8] sm:$0x1]
        %v1838 = vlaneseq
        %v1839 = vshrl.u32 %v1838, 7
        %v1840 = vsub.s32 0, %v1839
        %v1841 = vrot.slane %v1836, %v1840
        %v1843 = vmul.f32 %v1822, %v1841
        %v1844 = vmul.f32 %v1825, %v1841
        %v1845 = vmul.f32 %v1830, %v1841
        %v1846 = vmul.f32 %v1833, %v1841
        %v1847 = vld [vmem:[%s9] sm:$0x1]
        %v1849 = vlaneseq
        %v1850 = vshrl.u32 %v1849, 7
        %v1851 = vsub.s32 0, %v1850
        %v1852 = vrot.slane %v1847, %v1851
        %v1854 = vadd.f32 %v1843, %v1852
        %v1855 = vadd.f32 %v1844, %v1852
        %v1856 = vadd.f32 %v1845, %v1852
        %v1857 = vadd.f32 %v1846, %v1852
        %v1858 = vunpack.c.l.bf16 %v443
        %v1859 = vunpack.c.l.bf16 %v444
        %v1860 = vunpack.c.l.bf16 %v445
        %v1861 = vunpack.c.l.bf16 %v446
        %v1862 = vadd.f32 %v1854, %v1858
        %v1863 = vadd.f32 %v1855, %v1859
        %v1864 = vadd.f32 %v1856, %v1860
        %v1865 = vadd.f32 %v1857, %v1861
        %v1866 = vmax.f32 %v1862, 0.0
        %v1867 = vmax.f32 %v1863, 0.0
        %v1868 = vmax.f32 %v1864, 0.0
        %v1869 = vmax.f32 %v1865, 0.0
        %v1870 = vpack.c.bf16 %v1867, %v1866
        %v1871 = vpack.c.bf16 %v1869, %v1868
        %v1874 = vunpack.c.l.b16 %v1870
        %v1875 = vunpack.c.h.b16 %v1870
        %v1876 = vunpack.c.l.b16 %v1871
        %v1877 = vunpack.c.h.b16 %v1871
        %v1878 = vpack.c.b16 %v1874, %v1874
        %v1879 = vpack.c.b16 %v1875, %v1875
        %v1880 = vpack.c.b16 %v1876, %v1876
        %v1881 = vpack.c.b16 %v1877, %v1877
        %1886 = vst [vmem:[%s439] sm:$0xf] %v1878
        %1887 = vst [vmem:[%s439 + $0x4] sm:$0xf] %v1879
        %1888 = vst [vmem:[%s439 + $0x8] sm:$0xf] %v1880
        %1889 = vst [vmem:[%s439 + $0xc] sm:$0xf] %v1881
        %s1890 = sand.u32 %s268, 1
        %s1891 = scalar_lea.sflag [#allocation4], %s1890
        %s1892 = sand.u32 %s268, 1
        %s1893 = smul.addr %s1892, 16
        %s1894 = scalar_lea.vmem [#allocation10], %s1893
        // Predicated region
        $region77: #{tpu_custom_call.1} parent=59 // pred_check
          %p1895 = pneg %p278
        $region78: #{tpu_custom_call.1} parent=59 // pred_check_branch
          %1897 = sbr.rel (%p1895) target = $region80
        $region79: #{tpu_custom_call.1} parent=59 // pred_region
          %s1898 = smul.u32 4, %s34
          %s1900 = ssub.s32 256, 256
          %1901 = vsyncadd %s1891, %s1900
          %s1902 = smul.addr %s33, 8
          %s1903 = sadd.s32 %s1898, %s1902
          %s1904 = smul.addr %s1903, 64
          %s1905 = scalar_lea.hbm %s10, %s1904
          %s1906 = sshll.u32 %s1894, 4
          %s1907 = int_to_ptr.vmem [resolvable:$true] %s1906
          %1912 = dma.vmem_to_hbm [thread:$0]  %s1907, 256, %s1905, %s1891, 64, 64, 4
        $region80: #{tpu_custom_call.1} parent=59 // pred_fallthru
          _
      $region60: #{tpu_custom_call.1} parent=5 // pred_fallthru
        _
      %p1913 = scmp.le.s32.totalorder 2, %s24
      // Predicated region
      $region81: #{tpu_custom_call.1} parent=5 // pred_check
        %p1914 = pneg %p1913
      $region82: #{tpu_custom_call.1} parent=5 // pred_check_branch
        %1916 = sbr.rel (%p1914) target = $region84
      $region83: #{tpu_custom_call.1} parent=5 // pred_region
        %s1917 = ssub.s32 %s24, 2
        // Predicated region
        $region85: #{tpu_custom_call.1} parent=83 // pred_check
          %p1918 = pneg %p284
        $region86: #{tpu_custom_call.1} parent=83 // pred_check_branch
          %1920 = sbr.rel (%p1918) target = $region88
        $region87: #{tpu_custom_call.1} parent=83 // pred_region
          %s1921 = sand.u32 %s269, 1
          %s1922 = scalar_lea.sflag [#allocation4], %s1921
          %s1923 = sand.u32 %s269, 1
          %s1924 = smul.addr %s1923, 16
          %s1925 = scalar_lea.vmem [#allocation10], %s1924
          %1926 = dma.done %s1922, 256
        $region88: #{tpu_custom_call.1} parent=83 // pred_fallthru
          _
      $region84: #{tpu_custom_call.1} parent=5 // pred_fallthru
        _
    $region6: #{tpu_custom_call.1} parent=1 // loop_footer
      %s28 = sadd.s32 1, %s24
    $region7: #{tpu_custom_call.1} parent=1 // loop_footer_branch
      %23 = sbr.rel target = $region3
    $region8: #{tpu_custom_call.1} parent=1 // loop_exit
      _
    %1927 = vsyncpa [#allocation3], 1
    %s1928 = scalar_lea.sflag [#allocation3], 1
    %1929 = vsyncpa %s1928, 1
    %1930 = vsyncpa [#allocation6], 1
    %1931 = vsyncpa [#allocation9], 1
    %1932 = vsyncpa [#allocation4], 1
    %s1933 = scalar_lea.sflag [#allocation4], 1
    %1934 = vsyncpa %s1933, 1

</llo_original>
